<compile_context>
chip_gen: v7x
topology: tpu7x:2x2x1
jax: 0.10.0
libtpu: 0.0.40
codegen_flags: <defaults>
</compile_context>

<pallas_src>
import numpy as np
import jax
import jax.numpy as jnp
from jax.experimental import pallas as pl
from jax.experimental.pallas import tpu as pltpu


# ---------------------------------------------------------------------------
# wrapper-side weight plumbing (free layout work, all jittable)
# ---------------------------------------------------------------------------
def _conv_tap_weights(w, WU, CI, CO):
    """w: (CO, CI, 3, 3) torch Conv2d weight -> per-row-tap block weights.

    Returns T of shape (3, 2, WU, CI, 2*WU*CO) with
      T[t, p', x', c, p*(WU*CO)+x*CO+m] = w[m, c, ky, kx]
    for the (ky, kx) taps consistent with packed-row tap t, sub-row p'->p and
    x' = x + kx - 1 (horizontal SAME padding baked in: no entry for x' OOB).
    """
    wk = jnp.transpose(w, (2, 3, 1, 0))              # (ky, kx, CI, CO)
    D = np.zeros((3, WU, WU), np.float32)            # D[kx, x', x] = [x'==x+kx-1]
    for x in range(WU):
        for kx in range(3):
            xp = x + kx - 1
            if 0 <= xp < WU:
                D[kx, xp, x] = 1.0
    E = np.zeros((3, 3, 2, 2), np.float32)           # E[ky, t, p', p]
    for p in range(2):
        for ky in range(3):
            dy = ky - 1
            pp = (p + dy) % 2
            t = (p + dy - pp) // 2 + 1
            E[ky, t, pp, p] = 1.0
    band = jnp.einsum('dab,kdcm->kabcm', jnp.asarray(D), wk)      # (ky,x',x,CI,CO)
    T = jnp.einsum('ktqp,kabcm->tqacpbm', jnp.asarray(E), band)   # (t,p',x',c,p,x,m)
    return T.reshape(3, 2, WU, CI, 2 * WU * CO)


def _upsample_aug_matrix(wup, bup, WS, WU, C1, Ch):
    """ConvTranspose2d(k=2,s=2) as a matrix on packed x1 rows, + bias row.

    Returns (WS*C1 + 1, 2*WU*Ch):
      rows j*C1+ci map x1[ci, i, j] to up lanes p*(WU*Ch)+(2j+q)*Ch+co,
      the last row (driven by x1's appended ones-lane) carries bup.
    """
    G = np.zeros((2, WU, WS), np.float32)            # G[q, x, j] = [x == 2j+q]
    for j in range(WS):
        for q in range(2):
            G[q, 2 * j + q, j] = 1.0
    W = jnp.einsum('qxj,cdpq->jcpxd', jnp.asarray(G), wup)        # (WS,C1,2,WU,Ch)
    W = W.reshape(WS * C1, 2 * WU * Ch)
    brow = jnp.tile(bup, 2 * WU).reshape(1, 2 * WU * Ch)
    return jnp.concatenate([W, brow], axis=0)


# ---------------------------------------------------------------------------
# the Pallas kernel (one image per grid step)
# ---------------------------------------------------------------------------
def _make_up_kernel(R, L2, LO):
    def kernel(x1_ref, x2_ref, w1x2_ref, w1up_ref, b1_ref, w2_ref, b2_ref,
               o_ref, h1s):
        # ---- conv1 (+ folded upsample): 3 accumulating tap matmuls, f32 acc ---
        acc = jnp.dot(x2_ref[pl.ds(0, R), :], w1x2_ref[0],
                      preferred_element_type=jnp.float32)
        acc += jnp.dot(x1_ref[pl.ds(0, R), :], w1up_ref[0],
                       preferred_element_type=jnp.float32)
        for t in (1, 2):
            acc += jnp.dot(x2_ref[pl.ds(t, R), :], w1x2_ref[t],
                           preferred_element_type=jnp.float32)
            acc += jnp.dot(x1_ref[pl.ds(t, R), :], w1up_ref[t],
                           preferred_element_type=jnp.float32)
        h1 = acc + b1_ref[...]
        h1 = jnp.maximum(h1, 0.2 * h1)                 # LeakyReLU(0.2) in f32

        # ---- conv2 taps read from a small zero-padded bf16 VMEM scratch ----
        zrow = jnp.zeros((1, L2), jnp.bfloat16)
        h1s[pl.ds(0, 1), :] = zrow                     # top vertical SAME pad
        h1s[pl.ds(R + 1, 1), :] = zrow                 # bottom vertical SAME pad
        h1s[pl.ds(1, R), :] = h1.astype(jnp.bfloat16)

        acc2 = jnp.dot(h1s[pl.ds(0, R), :], w2_ref[0],
                       preferred_element_type=jnp.float32)
        for t in (1, 2):
            acc2 += jnp.dot(h1s[pl.ds(t, R), :], w2_ref[t],
                            preferred_element_type=jnp.float32)
        h2 = acc2 + b2_ref[...]
        h2 = jnp.maximum(h2, 0.2 * h2)
        o_ref[...] = h2                                # lane-dense f32 store
    return kernel


def up_forward(x1, x2, wup, bup, w1, b1, w2, b2):
    N, C1, HS, WS = x1.shape
    _, Ch, HU, WU = x2.shape
    CMID = w1.shape[0]
    COUT = w2.shape[0]
    assert Ch == C1 // 2 and HU == 2 * HS and WU == 2 * WS

    R = HS                       # packed rows per image (each holds 2 img rows)
    HALF1 = 2 * WU * Ch          # lanes of the packed x2 (== up) half
    X1AUG = WS * C1 + 1          # packed x1 lanes + ones-lane (bias carrier)
    L2 = 2 * WU * CMID
    LO = 2 * WU * COUT

    # ---- wrapper-side layout plumbing (free) ----
    # packed x2: lane = p*(WU*Ch)+x*Ch+c ; packed row r holds y = 2r, 2r+1
    x2p = jnp.transpose(x2, (0, 2, 3, 1)).reshape(N, R, HALF1)
    x2b = jnp.pad(x2p, ((0, 0), (1, 1), (0, 0))).astype(jnp.bfloat16)
    # packed x1 + ones-lane; zero rows top/bottom give vertical SAME padding
    x1p = jnp.transpose(x1, (0, 2, 3, 1)).reshape(N, R, WS * C1)
    x1a = jnp.concatenate([x1p, jnp.ones((N, R, 1), x1.dtype)], axis=-1)
    x1b = jnp.pad(x1a, ((0, 0), (1, 1), (0, 0))).astype(jnp.bfloat16)

    # per-tap block weights (horizontal SAME pad baked in), upsample folded in
    T1 = _conv_tap_weights(w1, WU, C1, CMID)                 # (3,2,WU,C1,L2)
    w1x2 = T1[:, :, :, :Ch, :].reshape(3, HALF1, L2)
    t1up = T1[:, :, :, Ch:, :].reshape(3, HALF1, L2)
    wupa = _upsample_aug_matrix(wup, bup, WS, WU, C1, Ch)    # (X1AUG, HALF1)
    w1up = jnp.einsum('ah,thl->tal', wupa, t1up)             # (3, X1AUG, L2)
    w2t = _conv_tap_weights(w2, WU, CMID, COUT).reshape(3, L2, LO)

    w1x2 = w1x2.astype(jnp.bfloat16)
    w1up = w1up.astype(jnp.bfloat16)
    w2t = w2t.astype(jnp.bfloat16)
    b1l = jnp.tile(b1, 2 * WU).reshape(1, L2).astype(jnp.float32)
    b2l = jnp.tile(b2, 2 * WU).reshape(1, LO).astype(jnp.float32)

    # VMEM budget: double-buffered per-step blocks + resident weights + scratch
    vmem_need = (2 * ((R + 2) * (X1AUG + HALF1) * 2 + R * LO * 4)
                 + 2 * (3 * (HALF1 + X1AUG) * L2 + 3 * L2 * LO) * 2
                 + 2 * (L2 + LO) * 4
                 + (R + 2) * L2 * 2)
    vmem_limit = int(min(64 * 1024 * 1024,
                         max(8 * 1024 * 1024, 2 * vmem_need)))

    kernel = _make_up_kernel(R, L2, LO)
    out = pl.pallas_call(
        kernel,
        out_shape=jax.ShapeDtypeStruct((N, R, LO), jnp.float32),
        grid_spec=pltpu.PrefetchScalarGridSpec(
            num_scalar_prefetch=0,
            grid=(N,),                                   # one image per step
            in_specs=[
                pl.BlockSpec((None, R + 2, X1AUG), lambda i: (i, 0, 0)),
                pl.BlockSpec((None, R + 2, HALF1), lambda i: (i, 0, 0)),
                pl.BlockSpec((3, HALF1, L2), lambda i: (0, 0, 0)),
                pl.BlockSpec((3, X1AUG, L2), lambda i: (0, 0, 0)),
                pl.BlockSpec((1, L2), lambda i: (0, 0)),
                pl.BlockSpec((3, L2, LO), lambda i: (0, 0, 0)),
                pl.BlockSpec((1, LO), lambda i: (0, 0)),
            ],
            out_specs=pl.BlockSpec((None, R, LO), lambda i: (i, 0, 0)),
            scratch_shapes=[pltpu.VMEM((R + 2, L2), jnp.bfloat16)],
        ),
        compiler_params=pltpu.CompilerParams(
            dimension_semantics=("parallel",),           # megacore on v7x
            vmem_limit_bytes=vmem_limit,
        ),
    )(x1b, x2b, w1x2, w1up, b1l, w2t, b2l)

    # glue: (N, HU/2, 2*WU*COUT) -> NCHW (N, COUT, HU, WU)
    out = out.reshape(N, R, 2, WU, COUT).reshape(N, HU, WU, COUT)
    return jnp.transpose(out, (0, 3, 1, 2))


# ---------------------------------------------------------------------------
# pure-JAX reference matching the PyTorch module
# ---------------------------------------------------------------------------
def ref_up(x1, x2, wup, bup, w1, b1, w2, b2):
    N, C1, HS, WS = x1.shape
    Ch = C1 // 2
    up = jnp.einsum('ncij,cdkl->ndikjl', x1, wup)
    up = up.reshape(N, Ch, 2 * HS, 2 * WS) + bup[None, :, None, None]
    x = jnp.concatenate([x2, up], axis=1)

    def conv(h, w, b):
        y = jax.lax.conv_general_dilated(
            h, w, (1, 1), 'SAME', dimension_numbers=('NCHW', 'OIHW', 'NCHW'))
        return y + b[None, :, None, None]

    h = conv(x, w1, b1)
    h = jnp.where(h >= 0, h, 0.2 * h)
    h = conv(h, w2, b2)
    h = jnp.where(h >= 0, h, 0.2 * h)
    return h


if __name__ == "__main__":
    N, IN_CH, MID_CH, OUT_CH = 2, 8, 8, 8
    HS = WS = 8                       # x1 spatial; x2 / output spatial = 16
    SKIP_CH = IN_CH // 2

    key = jax.random.PRNGKey(0)
    k1, k2, kwu, kbu, kw1, kb1, kw2, kb2 = jax.random.split(key, 8)
    x1 = jax.random.normal(k1, (N, IN_CH, HS, WS), dtype=jnp.float32)
    x2 = jax.random.normal(k2, (N, SKIP_CH, 2 * HS, 2 * WS), dtype=jnp.float32)
    wup = 0.1 * jax.random.normal(kwu, (IN_CH, SKIP_CH, 2, 2), dtype=jnp.float32)
    bup = 0.1 * jax.random.normal(kbu, (SKIP_CH,), dtype=jnp.float32)
    w1 = 0.1 * jax.random.normal(kw1, (MID_CH, IN_CH, 3, 3), dtype=jnp.float32)
    b1 = 0.1 * jax.random.normal(kb1, (MID_CH,), dtype=jnp.float32)
    w2 = 0.1 * jax.random.normal(kw2, (OUT_CH, MID_CH, 3, 3), dtype=jnp.float32)
    b2 = 0.1 * jax.random.normal(kb2, (OUT_CH,), dtype=jnp.float32)

    out = jax.jit(up_forward)(x1, x2, wup, bup, w1, b1, w2, b2)
    out = jax.block_until_ready(out)

    expected = ref_up(x1, x2, wup, bup, w1, b1, w2, b2)
    assert out.shape == (N, OUT_CH, 2 * HS, 2 * WS), out.shape
    # bf16 MXU operands with f32 accumulation: loosen tolerance vs pure-f32 ref
    assert jnp.allclose(out, expected, atol=5e-2, rtol=5e-2), (
        float(jnp.max(jnp.abs(out - expected))))
    print("KERNEL_OK")
</pallas_src>

<mosaic_0001>
module attributes {stable_mosaic.version = 11 : i64} {
  func.func @kernel(%arg0: i32, %arg1: memref<1x10x65xbf16, #tpu.memory_space<vmem>>, %arg2: memref<1x10x128xbf16, #tpu.memory_space<vmem>>, %arg3: memref<3x128x256xbf16, #tpu.memory_space<vmem>>, %arg4: memref<3x65x256xbf16, #tpu.memory_space<vmem>>, %arg5: memref<1x256xf32, #tpu.memory_space<vmem>>, %arg6: memref<3x256x256xbf16, #tpu.memory_space<vmem>>, %arg7: memref<1x256xf32, #tpu.memory_space<vmem>>, %arg8: memref<1x8x256xf32, #tpu.memory_space<vmem>>, %arg9: memref<10x256xbf16, #tpu.memory_space<vmem>>) attributes {dimension_semantics = [#tpu.dimension_semantics<parallel>], iteration_bounds = array<i64: 2>, scalar_prefetch = 0 : i64, scratch_operands = 1 : i64, tpu.core_type = #tpu.core_type<tc>, window_params = [{transform_indices = @transform_0, window_bounds = array<i64: 1, 10, 65>}, {transform_indices = @transform_1, window_bounds = array<i64: 1, 10, 128>}, {pipeline_mode = #tpu.pipeline_mode<synchronous>, transform_indices = @transform_2, window_bounds = array<i64: 3, 128, 256>}, {pipeline_mode = #tpu.pipeline_mode<synchronous>, transform_indices = @transform_3, window_bounds = array<i64: 3, 65, 256>}, {pipeline_mode = #tpu.pipeline_mode<synchronous>, transform_indices = @transform_4, window_bounds = array<i64: 1, 256>}, {pipeline_mode = #tpu.pipeline_mode<synchronous>, transform_indices = @transform_5, window_bounds = array<i64: 3, 256, 256>}, {pipeline_mode = #tpu.pipeline_mode<synchronous>, transform_indices = @transform_6, window_bounds = array<i64: 1, 256>}, {transform_indices = @transform_7, window_bounds = array<i64: 1, 8, 256>}]} {
    %c0 = arith.constant 0 : index
    %c0_0 = arith.constant 0 : index
    %c0_1 = arith.constant 0 : index
    %0 = vector.load %arg2[%c0, %c0_0, %c0_1] : memref<1x10x128xbf16, #tpu.memory_space<vmem>>, vector<1x8x128xbf16>
    %1 = vector.shape_cast %0 : vector<1x8x128xbf16> to vector<8x128xbf16>
    %c0_2 = arith.constant 0 : index
    %c0_3 = arith.constant 0 : index
    %c0_4 = arith.constant 0 : index
    %2 = vector.load %arg3[%c0_2, %c0_3, %c0_4] : memref<3x128x256xbf16, #tpu.memory_space<vmem>>, vector<1x128x256xbf16>
    %3 = vector.shape_cast %2 : vector<1x128x256xbf16> to vector<128x256xbf16>
    %cst = arith.constant dense<0.000000e+00> : vector<8x256xf32>
    %4 = tpu.matmul %1, %3, %cst {dimension_numbers = #tpu.dot_dimension_numbers<[1], [0], [0], [1], [0, 0, 1, 1], [], []>} : vector<8x128xbf16>, vector<128x256xbf16>, vector<8x256xf32> -> vector<8x256xf32>
    %c0_5 = arith.constant 0 : index
    %c0_6 = arith.constant 0 : index
    %c0_7 = arith.constant 0 : index
    %5 = vector.load %arg1[%c0_5, %c0_6, %c0_7] : memref<1x10x65xbf16, #tpu.memory_space<vmem>>, vector<1x8x65xbf16>
    %6 = vector.shape_cast %5 : vector<1x8x65xbf16> to vector<8x65xbf16>
    %c0_8 = arith.constant 0 : index
    %c0_9 = arith.constant 0 : index
    %c0_10 = arith.constant 0 : index
    %7 = vector.load %arg4[%c0_8, %c0_9, %c0_10] : memref<3x65x256xbf16, #tpu.memory_space<vmem>>, vector<1x65x256xbf16>
    %8 = vector.shape_cast %7 : vector<1x65x256xbf16> to vector<65x256xbf16>
    %cst_11 = arith.constant dense<0.000000e+00> : vector<8x256xf32>
    %9 = tpu.matmul %6, %8, %cst_11 {dimension_numbers = #tpu.dot_dimension_numbers<[1], [0], [0], [1], [0, 0, 1, 1], [], []>} : vector<8x65xbf16>, vector<65x256xbf16>, vector<8x256xf32> -> vector<8x256xf32>
    %10 = arith.addf %4, %9 : vector<8x256xf32>
    %c0_12 = arith.constant 0 : index
    %c1 = arith.constant 1 : index
    %c0_13 = arith.constant 0 : index
    %11 = vector.load %arg2[%c0_12, %c1, %c0_13] : memref<1x10x128xbf16, #tpu.memory_space<vmem>>, vector<1x8x128xbf16>
    %12 = vector.shape_cast %11 : vector<1x8x128xbf16> to vector<8x128xbf16>
    %c1_14 = arith.constant 1 : index
    %c0_15 = arith.constant 0 : index
    %c0_16 = arith.constant 0 : index
    %13 = vector.load %arg3[%c1_14, %c0_15, %c0_16] : memref<3x128x256xbf16, #tpu.memory_space<vmem>>, vector<1x128x256xbf16>
    %14 = vector.shape_cast %13 : vector<1x128x256xbf16> to vector<128x256xbf16>
    %cst_17 = arith.constant dense<0.000000e+00> : vector<8x256xf32>
    %15 = tpu.matmul %12, %14, %cst_17 {dimension_numbers = #tpu.dot_dimension_numbers<[1], [0], [0], [1], [0, 0, 1, 1], [], []>} : vector<8x128xbf16>, vector<128x256xbf16>, vector<8x256xf32> -> vector<8x256xf32>
    %16 = arith.addf %10, %15 : vector<8x256xf32>
    %c0_18 = arith.constant 0 : index
    %c1_19 = arith.constant 1 : index
    %c0_20 = arith.constant 0 : index
    %17 = vector.load %arg1[%c0_18, %c1_19, %c0_20] : memref<1x10x65xbf16, #tpu.memory_space<vmem>>, vector<1x8x65xbf16>
    %18 = vector.shape_cast %17 : vector<1x8x65xbf16> to vector<8x65xbf16>
    %c1_21 = arith.constant 1 : index
    %c0_22 = arith.constant 0 : index
    %c0_23 = arith.constant 0 : index
    %19 = vector.load %arg4[%c1_21, %c0_22, %c0_23] : memref<3x65x256xbf16, #tpu.memory_space<vmem>>, vector<1x65x256xbf16>
    %20 = vector.shape_cast %19 : vector<1x65x256xbf16> to vector<65x256xbf16>
    %cst_24 = arith.constant dense<0.000000e+00> : vector<8x256xf32>
    %21 = tpu.matmul %18, %20, %cst_24 {dimension_numbers = #tpu.dot_dimension_numbers<[1], [0], [0], [1], [0, 0, 1, 1], [], []>} : vector<8x65xbf16>, vector<65x256xbf16>, vector<8x256xf32> -> vector<8x256xf32>
    %22 = arith.addf %16, %21 : vector<8x256xf32>
    %c0_25 = arith.constant 0 : index
    %c2 = arith.constant 2 : index
    %c0_26 = arith.constant 0 : index
    %23 = vector.load %arg2[%c0_25, %c2, %c0_26] : memref<1x10x128xbf16, #tpu.memory_space<vmem>>, vector<1x8x128xbf16>
    %24 = vector.shape_cast %23 : vector<1x8x128xbf16> to vector<8x128xbf16>
    %c2_27 = arith.constant 2 : index
    %c0_28 = arith.constant 0 : index
    %c0_29 = arith.constant 0 : index
    %25 = vector.load %arg3[%c2_27, %c0_28, %c0_29] : memref<3x128x256xbf16, #tpu.memory_space<vmem>>, vector<1x128x256xbf16>
    %26 = vector.shape_cast %25 : vector<1x128x256xbf16> to vector<128x256xbf16>
    %cst_30 = arith.constant dense<0.000000e+00> : vector<8x256xf32>
    %27 = tpu.matmul %24, %26, %cst_30 {dimension_numbers = #tpu.dot_dimension_numbers<[1], [0], [0], [1], [0, 0, 1, 1], [], []>} : vector<8x128xbf16>, vector<128x256xbf16>, vector<8x256xf32> -> vector<8x256xf32>
    %28 = arith.addf %22, %27 : vector<8x256xf32>
    %c0_31 = arith.constant 0 : index
    %c2_32 = arith.constant 2 : index
    %c0_33 = arith.constant 0 : index
    %29 = vector.load %arg1[%c0_31, %c2_32, %c0_33] : memref<1x10x65xbf16, #tpu.memory_space<vmem>>, vector<1x8x65xbf16>
    %30 = vector.shape_cast %29 : vector<1x8x65xbf16> to vector<8x65xbf16>
    %c2_34 = arith.constant 2 : index
    %c0_35 = arith.constant 0 : index
    %c0_36 = arith.constant 0 : index
    %31 = vector.load %arg4[%c2_34, %c0_35, %c0_36] : memref<3x65x256xbf16, #tpu.memory_space<vmem>>, vector<1x65x256xbf16>
    %32 = vector.shape_cast %31 : vector<1x65x256xbf16> to vector<65x256xbf16>
    %cst_37 = arith.constant dense<0.000000e+00> : vector<8x256xf32>
    %33 = tpu.matmul %30, %32, %cst_37 {dimension_numbers = #tpu.dot_dimension_numbers<[1], [0], [0], [1], [0, 0, 1, 1], [], []>} : vector<8x65xbf16>, vector<65x256xbf16>, vector<8x256xf32> -> vector<8x256xf32>
    %34 = arith.addf %28, %33 : vector<8x256xf32>
    %c0_38 = arith.constant 0 : index
    %c0_39 = arith.constant 0 : index
    %35 = vector.load %arg5[%c0_38, %c0_39] : memref<1x256xf32, #tpu.memory_space<vmem>>, vector<1x256xf32>
    %36 = vector.broadcast %35 : vector<1x256xf32> to vector<8x256xf32>
    %37 = arith.addf %34, %36 : vector<8x256xf32>
    %cst_40 = arith.constant 2.000000e-01 : f32
    %38 = vector.broadcast %cst_40 : f32 to vector<8x256xf32>
    %39 = arith.mulf %38, %37 : vector<8x256xf32>
    %40 = arith.maximumf %37, %39 : vector<8x256xf32>
    %cst_41 = arith.constant 0.000000e+00 : bf16
    %41 = vector.broadcast %cst_41 : bf16 to vector<1x256xbf16>
    %c0_42 = arith.constant 0 : index
    %c0_43 = arith.constant 0 : index
    %42 = vector.load %arg9[%c0_42, %c0_43] : memref<10x256xbf16, #tpu.memory_space<vmem>>, vector<1x256xbf16>
    tpu.vector_store %arg9[%c0_42, %c0_43], %41 {strides = array<i32>} : memref<10x256xbf16, #tpu.memory_space<vmem>>, vector<1x256xbf16>,
    %c9 = arith.constant 9 : index
    %c0_44 = arith.constant 0 : index
    %43 = vector.load %arg9[%c9, %c0_44] : memref<10x256xbf16, #tpu.memory_space<vmem>>, vector<1x256xbf16>
    tpu.vector_store %arg9[%c9, %c0_44], %41 {strides = array<i32>} : memref<10x256xbf16, #tpu.memory_space<vmem>>, vector<1x256xbf16>,
    %44 = arith.truncf %40 : vector<8x256xf32> to vector<8x256xbf16>
    %c1_45 = arith.constant 1 : index
    %c0_46 = arith.constant 0 : index
    %45 = vector.load %arg9[%c1_45, %c0_46] : memref<10x256xbf16, #tpu.memory_space<vmem>>, vector<8x256xbf16>
    tpu.vector_store %arg9[%c1_45, %c0_46], %44 {strides = array<i32>} : memref<10x256xbf16, #tpu.memory_space<vmem>>, vector<8x256xbf16>,
    %c0_47 = arith.constant 0 : index
    %c0_48 = arith.constant 0 : index
    %46 = vector.load %arg9[%c0_47, %c0_48] : memref<10x256xbf16, #tpu.memory_space<vmem>>, vector<8x256xbf16>
    %c0_49 = arith.constant 0 : index
    %c0_50 = arith.constant 0 : index
    %c0_51 = arith.constant 0 : index
    %47 = vector.load %arg6[%c0_49, %c0_50, %c0_51] : memref<3x256x256xbf16, #tpu.memory_space<vmem>>, vector<1x256x256xbf16>
    %48 = vector.shape_cast %47 : vector<1x256x256xbf16> to vector<256x256xbf16>
    %cst_52 = arith.constant dense<0.000000e+00> : vector<8x256xf32>
    %49 = tpu.matmul %46, %48, %cst_52 {dimension_numbers = #tpu.dot_dimension_numbers<[1], [0], [0], [1], [0, 0, 1, 1], [], []>} : vector<8x256xbf16>, vector<256x256xbf16>, vector<8x256xf32> -> vector<8x256xf32>
    %c1_53 = arith.constant 1 : index
    %c0_54 = arith.constant 0 : index
    %50 = vector.load %arg9[%c1_53, %c0_54] : memref<10x256xbf16, #tpu.memory_space<vmem>>, vector<8x256xbf16>
    %c1_55 = arith.constant 1 : index
    %c0_56 = arith.constant 0 : index
    %c0_57 = arith.constant 0 : index
    %51 = vector.load %arg6[%c1_55, %c0_56, %c0_57] : memref<3x256x256xbf16, #tpu.memory_space<vmem>>, vector<1x256x256xbf16>
    %52 = vector.shape_cast %51 : vector<1x256x256xbf16> to vector<256x256xbf16>
    %cst_58 = arith.constant dense<0.000000e+00> : vector<8x256xf32>
    %53 = tpu.matmul %50, %52, %cst_58 {dimension_numbers = #tpu.dot_dimension_numbers<[1], [0], [0], [1], [0, 0, 1, 1], [], []>} : vector<8x256xbf16>, vector<256x256xbf16>, vector<8x256xf32> -> vector<8x256xf32>
    %54 = arith.addf %49, %53 : vector<8x256xf32>
    %c2_59 = arith.constant 2 : index
    %c0_60 = arith.constant 0 : index
    %55 = vector.load %arg9[%c2_59, %c0_60] : memref<10x256xbf16, #tpu.memory_space<vmem>>, vector<8x256xbf16>
    %c2_61 = arith.constant 2 : index
    %c0_62 = arith.constant 0 : index
    %c0_63 = arith.constant 0 : index
    %56 = vector.load %arg6[%c2_61, %c0_62, %c0_63] : memref<3x256x256xbf16, #tpu.memory_space<vmem>>, vector<1x256x256xbf16>
    %57 = vector.shape_cast %56 : vector<1x256x256xbf16> to vector<256x256xbf16>
    %cst_64 = arith.constant dense<0.000000e+00> : vector<8x256xf32>
    %58 = tpu.matmul %55, %57, %cst_64 {dimension_numbers = #tpu.dot_dimension_numbers<[1], [0], [0], [1], [0, 0, 1, 1], [], []>} : vector<8x256xbf16>, vector<256x256xbf16>, vector<8x256xf32> -> vector<8x256xf32>
    %59 = arith.addf %54, %58 : vector<8x256xf32>
    %c0_65 = arith.constant 0 : index
    %c0_66 = arith.constant 0 : index
    %60 = vector.load %arg7[%c0_65, %c0_66] : memref<1x256xf32, #tpu.memory_space<vmem>>, vector<1x256xf32>
    %61 = vector.broadcast %60 : vector<1x256xf32> to vector<8x256xf32>
    %62 = arith.addf %59, %61 : vector<8x256xf32>
    %cst_67 = arith.constant 2.000000e-01 : f32
    %63 = vector.broadcast %cst_67 : f32 to vector<8x256xf32>
    %64 = arith.mulf %63, %62 : vector<8x256xf32>
    %65 = arith.maximumf %62, %64 : vector<8x256xf32>
    %c0_68 = arith.constant 0 : index
    %c0_69 = arith.constant 0 : index
    %c0_70 = arith.constant 0 : index
    %66 = vector.load %arg8[%c0_68, %c0_69, %c0_70] : memref<1x8x256xf32, #tpu.memory_space<vmem>>, vector<1x8x256xf32>
    %67 = vector.shape_cast %66 : vector<1x8x256xf32> to vector<8x256xf32>
    %68 = vector.shape_cast %65 : vector<8x256xf32> to vector<1x8x256xf32>
    tpu.vector_store %arg8[%c0_68, %c0_69, %c0_70], %68 {strides = array<i32>} : memref<1x8x256xf32, #tpu.memory_space<vmem>>, vector<1x8x256xf32>,
    return
  }
  func.func @transform_0(%arg0: i32) -> (i32, i32, i32) {
    %c0_i32 = arith.constant 0 : i32
    %c0_i32_0 = arith.constant 0 : i32
    %c0_i32_1 = arith.constant 0 : i32
    return %arg0, %c0_i32, %c0_i32_0 : i32, i32, i32
  }
  func.func @transform_1(%arg0: i32) -> (i32, i32, i32) {
    %c0_i32 = arith.constant 0 : i32
    %c0_i32_0 = arith.constant 0 : i32
    %c0_i32_1 = arith.constant 0 : i32
    return %arg0, %c0_i32, %c0_i32_0 : i32, i32, i32
  }
  func.func @transform_2(%arg0: i32) -> (i32, i32, i32) {
    %c0_i32 = arith.constant 0 : i32
    %c0_i32_0 = arith.constant 0 : i32
    %c0_i32_1 = arith.constant 0 : i32
    %c0_i32_2 = arith.constant 0 : i32
    return %c0_i32, %c0_i32_0, %c0_i32_1 : i32, i32, i32
  }
  func.func @transform_3(%arg0: i32) -> (i32, i32, i32) {
    %c0_i32 = arith.constant 0 : i32
    %c0_i32_0 = arith.constant 0 : i32
    %c0_i32_1 = arith.constant 0 : i32
    %c0_i32_2 = arith.constant 0 : i32
    return %c0_i32, %c0_i32_0, %c0_i32_1 : i32, i32, i32
  }
  func.func @transform_4(%arg0: i32) -> (i32, i32) {
    %c0_i32 = arith.constant 0 : i32
    %c0_i32_0 = arith.constant 0 : i32
    %c0_i32_1 = arith.constant 0 : i32
    return %c0_i32, %c0_i32_0 : i32, i32
  }
  func.func @transform_5(%arg0: i32) -> (i32, i32, i32) {
    %c0_i32 = arith.constant 0 : i32
    %c0_i32_0 = arith.constant 0 : i32
    %c0_i32_1 = arith.constant 0 : i32
    %c0_i32_2 = arith.constant 0 : i32
    return %c0_i32, %c0_i32_0, %c0_i32_1 : i32, i32, i32
  }
  func.func @transform_6(%arg0: i32) -> (i32, i32) {
    %c0_i32 = arith.constant 0 : i32
    %c0_i32_0 = arith.constant 0 : i32
    %c0_i32_1 = arith.constant 0 : i32
    return %c0_i32, %c0_i32_0 : i32, i32
  }
  func.func @transform_7(%arg0: i32) -> (i32, i32, i32) {
    %c0_i32 = arith.constant 0 : i32
    %c0_i32_0 = arith.constant 0 : i32
    %c0_i32_1 = arith.constant 0 : i32
    return %arg0, %c0_i32, %c0_i32_0 : i32, i32, i32
  }
}

</mosaic_0001>

<llo_original>
// kernel: tile.18
$region0: #{tile.18}
  #allocation0 [shape = 's32[1]{0}', space=sflag, size = 0x4, scoped, tag = 'scoped memory for tile.18']
  %s0 = inlined_call_operand.vmem [shape: f32[4], index: 0, kind: input, shape index: {}]
  %s1 = inlined_call_operand.vmem [shape: bf16[32,4], index: 1, kind: output, shape index: {}]
  // Predicated region
  $region2: #{tile.18} parent=0 // pred_check
    _
  $region3: #{tile.18} parent=0 // pred_check_branch
    %3 = sbr.rel (0) target = $region5
  $region4: #{tile.18} parent=0 // pred_region
    _
  $region5: #{tile.18} parent=0 // pred_fallthru
    _
  %v4 = vld [vmem:[%s0] ss:$0 sm:$0xff]
  %v5 = vpack.c.bf16 0.0, %v4
  %6 = vst [vmem:[%s1] sm:$0xf] %v5
  %s7 = scalar_lea.vmem %s1, 4
  %v8 = vpack.c.bf16 0.0, %v4
  %9 = vst [vmem:[%s7] sm:$0xf] %v8
  %s10 = scalar_lea.vmem %s1, 8
  %v11 = vpack.c.bf16 0.0, %v4
  %12 = vst [vmem:[%s10] sm:$0xf] %v11
  %s13 = scalar_lea.vmem %s1, 12
  %v14 = vpack.c.bf16 0.0, %v4
  %15 = vst [vmem:[%s13] sm:$0xf] %v14

// kernel: tile.19
$region0: #{tile.19}
  %s0 = inlined_call_operand.vmem [shape: bf16[32,4], index: 0, kind: input, shape index: {}]
  %s1 = inlined_call_operand.vmem [shape: bf16[1,128], index: 1, kind: output, shape index: {}]
  $region1: #{tile.19} parent=0
    #allocation0 [shape = 'u8[4096]{0}', space=vmem, size = 0x1000, scoped, tag = 'scoped mem for output reshape']
    #allocation1 [shape = 'u8[16384]{0}', space=vmem, size = 0x4000, scoped, tag = 'scoped mem for input reshape']
    %s3 = smul.u32 4, 2
    %s4 = sshllo.u32 0, %s3
    %s5 = smul.addr 4, 3
    %s6 = scalar_lea.vmem %s0, %s5
    %s7 = sshrl.u32 %s4, 1
    %s8 = sor.u32 %s4, %s7
    %s9 = sand.u32 %s8, 85
    %s10 = sshrl.u32 %s9, 1
    %s11 = sor.u32 %s9, %s10
    %s12 = sand.u32 51, %s11
    %s13 = sshrl.u32 %s12, 2
    %s14 = sor.u32 %s12, %s13
    %s15 = sand.u32 15, %s14
    %v16 = vld [vmem:[%s6] sm:%s15]
    %v17 = vunpack.c.l.bf16 %v16
    %v18 = vunpack.c.h.bf16 %v16
    %s19 = scalar_lea.vmem [#allocation1], 24
    %20 = vst [vmem:[%s19] sm:%s4] %v17
    %s21 = smul.addr 4, 2
    %s22 = scalar_lea.vmem %s0, %s21
    %s23 = sshrl.u32 %s4, 1
    %s24 = sor.u32 %s4, %s23
    %s25 = sand.u32 %s24, 85
    %s26 = sshrl.u32 %s25, 1
    %s27 = sor.u32 %s25, %s26
    %s28 = sand.u32 51, %s27
    %s29 = sshrl.u32 %s28, 2
    %s30 = sor.u32 %s28, %s29
    %s31 = sand.u32 15, %s30
    %v32 = vld [vmem:[%s22] sm:%s31]
    %v33 = vunpack.c.l.bf16 %v32
    %v34 = vunpack.c.h.bf16 %v32
    %s35 = scalar_lea.vmem [#allocation1], 16
    %36 = vst [vmem:[%s35] sm:%s4] %v33
    %s37 = scalar_lea.vmem %s0, 4
    %s38 = sshrl.u32 %s4, 1
    %s39 = sor.u32 %s4, %s38
    %s40 = sand.u32 %s39, 85
    %s41 = sshrl.u32 %s40, 1
    %s42 = sor.u32 %s40, %s41
    %s43 = sand.u32 51, %s42
    %s44 = sshrl.u32 %s43, 2
    %s45 = sor.u32 %s43, %s44
    %s46 = sand.u32 15, %s45
    %v47 = vld [vmem:[%s37] sm:%s46]
    %v48 = vunpack.c.l.bf16 %v47
    %v49 = vunpack.c.h.bf16 %v47
    %s50 = scalar_lea.vmem [#allocation1], 8
    %51 = vst [vmem:[%s50] sm:%s4] %v48
    %s52 = sshrl.u32 %s4, 1
    %s53 = sor.u32 %s4, %s52
    %s54 = sand.u32 %s53, 85
    %s55 = sshrl.u32 %s54, 1
    %s56 = sor.u32 %s54, %s55
    %s57 = sand.u32 51, %s56
    %s58 = sshrl.u32 %s57, 2
    %s59 = sor.u32 %s57, %s58
    %s60 = sand.u32 15, %s59
    %v61 = vld [vmem:[%s0] sm:%s60]
    %v62 = vunpack.c.l.bf16 %v61
    %v63 = vunpack.c.h.bf16 %v61
    %64 = vst [vmem:[#allocation1] sm:%s4] %v62
    %v65 = vld [vmem:[#allocation1] sm:$0x1]
    %vm66 = vcmask 31744
    %67 = vst.msk [vmem:[#allocation0] sm:$0x1] %vm66, %v65
    %s68 = scalar_lea.vmem [#allocation1], 31
    %v69 = vld [vmem:[%s68] sm:$0x1]
    %70 = vrot.lane.b32.xlu0 %v69, 124
    %v71 = vpop.permute.xlu0 %70
    %vm72 = vcmask 1048544
    %73 = vst.msk [vmem:[#allocation0] sm:$0x1] %vm72, %v71
    %s74 = scalar_lea.vmem [#allocation1], 30
    %v75 = vld [vmem:[%s74] sm:$0x1]
    %76 = vrot.lane.b32.xlu0 %v75, 120
    %v77 = vpop.permute.xlu0 %76
    %vm78 = vcmask 1015744
    %79 = vst.msk [vmem:[#allocation0] sm:$0x1] %vm78, %v77
    %s80 = scalar_lea.vmem [#allocation1], 29
    %v81 = vld [vmem:[%s80] sm:$0x1]
    %82 = vrot.lane.b32.xlu0 %v81, 116
    %v83 = vpop.permute.xlu0 %82
    %vm84 = vcmask 982944
    %85 = vst.msk [vmem:[#allocation0] sm:$0x1] %vm84, %v83
    %s86 = scalar_lea.vmem [#allocation1], 28
    %v87 = vld [vmem:[%s86] sm:$0x1]
    %88 = vrot.lane.b32.xlu0 %v87, 112
    %v89 = vpop.permute.xlu0 %88
    %vm90 = vcmask 950144
    %91 = vst.msk [vmem:[#allocation0] sm:$0x1] %vm90, %v89
    %s92 = scalar_lea.vmem [#allocation1], 27
    %v93 = vld [vmem:[%s92] sm:$0x1]
    %94 = vrot.lane.b32.xlu0 %v93, 108
    %v95 = vpop.permute.xlu0 %94
    %vm96 = vcmask 917344
    %97 = vst.msk [vmem:[#allocation0] sm:$0x1] %vm96, %v95
    %s98 = scalar_lea.vmem [#allocation1], 26
    %v99 = vld [vmem:[%s98] sm:$0x1]
    %100 = vrot.lane.b32.xlu0 %v99, 104
    %v101 = vpop.permute.xlu0 %100
    %vm102 = vcmask 884544
    %103 = vst.msk [vmem:[#allocation0] sm:$0x1] %vm102, %v101
    %s104 = scalar_lea.vmem [#allocation1], 25
    %v105 = vld [vmem:[%s104] sm:$0x1]
    %106 = vrot.lane.b32.xlu0 %v105, 100
    %v107 = vpop.permute.xlu0 %106
    %vm108 = vcmask 851744
    %109 = vst.msk [vmem:[#allocation0] sm:$0x1] %vm108, %v107
    %s110 = scalar_lea.vmem [#allocation1], 24
    %v111 = vld [vmem:[%s110] sm:$0x1]
    %112 = vrot.lane.b32.xlu0 %v111, 96
    %v113 = vpop.permute.xlu0 %112
    %vm114 = vcmask 818944
    %115 = vst.msk [vmem:[#allocation0] sm:$0x1] %vm114, %v113
    %s116 = scalar_lea.vmem [#allocation1], 23
    %v117 = vld [vmem:[%s116] sm:$0x1]
    %118 = vrot.lane.b32.xlu0 %v117, 92
    %v119 = vpop.permute.xlu0 %118
    %vm120 = vcmask 786144
    %121 = vst.msk [vmem:[#allocation0] sm:$0x1] %vm120, %v119
    %s122 = scalar_lea.vmem [#allocation1], 22
    %v123 = vld [vmem:[%s122] sm:$0x1]
    %124 = vrot.lane.b32.xlu0 %v123, 88
    %v125 = vpop.permute.xlu0 %124
    %vm126 = vcmask 753344
    %127 = vst.msk [vmem:[#allocation0] sm:$0x1] %vm126, %v125
    %s128 = scalar_lea.vmem [#allocation1], 21
    %v129 = vld [vmem:[%s128] sm:$0x1]
    %130 = vrot.lane.b32.xlu0 %v129, 84
    %v131 = vpop.permute.xlu0 %130
    %vm132 = vcmask 720544
    %133 = vst.msk [vmem:[#allocation0] sm:$0x1] %vm132, %v131
    %s134 = scalar_lea.vmem [#allocation1], 20
    %v135 = vld [vmem:[%s134] sm:$0x1]
    %136 = vrot.lane.b32.xlu0 %v135, 80
    %v137 = vpop.permute.xlu0 %136
    %vm138 = vcmask 687744
    %139 = vst.msk [vmem:[#allocation0] sm:$0x1] %vm138, %v137
    %s140 = scalar_lea.vmem [#allocation1], 19
    %v141 = vld [vmem:[%s140] sm:$0x1]
    %142 = vrot.lane.b32.xlu0 %v141, 76
    %v143 = vpop.permute.xlu0 %142
    %vm144 = vcmask 654944
    %145 = vst.msk [vmem:[#allocation0] sm:$0x1] %vm144, %v143
    %s146 = scalar_lea.vmem [#allocation1], 18
    %v147 = vld [vmem:[%s146] sm:$0x1]
    %148 = vrot.lane.b32.xlu0 %v147, 72
    %v149 = vpop.permute.xlu0 %148
    %vm150 = vcmask 622144
    %151 = vst.msk [vmem:[#allocation0] sm:$0x1] %vm150, %v149
    %s152 = scalar_lea.vmem [#allocation1], 17
    %v153 = vld [vmem:[%s152] sm:$0x1]
    %154 = vrot.lane.b32.xlu0 %v153, 68
    %v155 = vpop.permute.xlu0 %154
    %vm156 = vcmask 589344
    %157 = vst.msk [vmem:[#allocation0] sm:$0x1] %vm156, %v155
    %s158 = scalar_lea.vmem [#allocation1], 16
    %v159 = vld [vmem:[%s158] sm:$0x1]
    %160 = vrot.lane.b32.xlu0 %v159, 64
    %v161 = vpop.permute.xlu0 %160
    %vm162 = vcmask 556544
    %163 = vst.msk [vmem:[#allocation0] sm:$0x1] %vm162, %v161
    %s164 = scalar_lea.vmem [#allocation1], 15
    %v165 = vld [vmem:[%s164] sm:$0x1]
    %166 = vrot.lane.b32.xlu0 %v165, 60
    %v167 = vpop.permute.xlu0 %166
    %vm168 = vcmask 523744
    %169 = vst.msk [vmem:[#allocation0] sm:$0x1] %vm168, %v167
    %s170 = scalar_lea.vmem [#allocation1], 14
    %v171 = vld [vmem:[%s170] sm:$0x1]
    %172 = vrot.lane.b32.xlu0 %v171, 56
    %v173 = vpop.permute.xlu0 %172
    %vm174 = vcmask 490944
    %175 = vst.msk [vmem:[#allocation0] sm:$0x1] %vm174, %v173
    %s176 = scalar_lea.vmem [#allocation1], 13
    %v177 = vld [vmem:[%s176] sm:$0x1]
    %178 = vrot.lane.b32.xlu0 %v177, 52
    %v179 = vpop.permute.xlu0 %178
    %vm180 = vcmask 458144
    %181 = vst.msk [vmem:[#allocation0] sm:$0x1] %vm180, %v179
    %s182 = scalar_lea.vmem [#allocation1], 12
    %v183 = vld [vmem:[%s182] sm:$0x1]
    %184 = vrot.lane.b32.xlu0 %v183, 48
    %v185 = vpop.permute.xlu0 %184
    %vm186 = vcmask 425344
    %187 = vst.msk [vmem:[#allocation0] sm:$0x1] %vm186, %v185
    %s188 = scalar_lea.vmem [#allocation1], 11
    %v189 = vld [vmem:[%s188] sm:$0x1]
    %190 = vrot.lane.b32.xlu0 %v189, 44
    %v191 = vpop.permute.xlu0 %190
    %vm192 = vcmask 392544
    %193 = vst.msk [vmem:[#allocation0] sm:$0x1] %vm192, %v191
    %s194 = scalar_lea.vmem [#allocation1], 10
    %v195 = vld [vmem:[%s194] sm:$0x1]
    %196 = vrot.lane.b32.xlu0 %v195, 40
    %v197 = vpop.permute.xlu0 %196
    %vm198 = vcmask 359744
    %199 = vst.msk [vmem:[#allocation0] sm:$0x1] %vm198, %v197
    %s200 = scalar_lea.vmem [#allocation1], 9
    %v201 = vld [vmem:[%s200] sm:$0x1]
    %202 = vrot.lane.b32.xlu0 %v201, 36
    %v203 = vpop.permute.xlu0 %202
    %vm204 = vcmask 326944
    %205 = vst.msk [vmem:[#allocation0] sm:$0x1] %vm204, %v203
    %s206 = scalar_lea.vmem [#allocation1], 8
    %v207 = vld [vmem:[%s206] sm:$0x1]
    %208 = vrot.lane.b32.xlu0 %v207, 32
    %v209 = vpop.permute.xlu0 %208
    %vm210 = vcmask 294144
    %211 = vst.msk [vmem:[#allocation0] sm:$0x1] %vm210, %v209
    %s212 = scalar_lea.vmem [#allocation1], 7
    %v213 = vld [vmem:[%s212] sm:$0x1]
    %214 = vrot.lane.b32.xlu0 %v213, 28
    %v215 = vpop.permute.xlu0 %214
    %vm216 = vcmask 261344
    %217 = vst.msk [vmem:[#allocation0] sm:$0x1] %vm216, %v215
    %s218 = scalar_lea.vmem [#allocation1], 6
    %v219 = vld [vmem:[%s218] sm:$0x1]
    %220 = vrot.lane.b32.xlu0 %v219, 24
    %v221 = vpop.permute.xlu0 %220
    %vm222 = vcmask 228544
    %223 = vst.msk [vmem:[#allocation0] sm:$0x1] %vm222, %v221
    %s224 = scalar_lea.vmem [#allocation1], 5
    %v225 = vld [vmem:[%s224] sm:$0x1]
    %226 = vrot.lane.b32.xlu0 %v225, 20
    %v227 = vpop.permute.xlu0 %226
    %vm228 = vcmask 195744
    %229 = vst.msk [vmem:[#allocation0] sm:$0x1] %vm228, %v227
    %s230 = scalar_lea.vmem [#allocation1], 4
    %v231 = vld [vmem:[%s230] sm:$0x1]
    %232 = vrot.lane.b32.xlu0 %v231, 16
    %v233 = vpop.permute.xlu0 %232
    %vm234 = vcmask 162944
    %235 = vst.msk [vmem:[#allocation0] sm:$0x1] %vm234, %v233
    %s236 = scalar_lea.vmem [#allocation1], 3
    %v237 = vld [vmem:[%s236] sm:$0x1]
    %238 = vrot.lane.b32.xlu0 %v237, 12
    %v239 = vpop.permute.xlu0 %238
    %vm240 = vcmask 130144
    %241 = vst.msk [vmem:[#allocation0] sm:$0x1] %vm240, %v239
    %s242 = scalar_lea.vmem [#allocation1], 2
    %v243 = vld [vmem:[%s242] sm:$0x1]
    %244 = vrot.lane.b32.xlu0 %v243, 8
    %v245 = vpop.permute.xlu0 %244
    %vm246 = vcmask 97344
    %247 = vst.msk [vmem:[#allocation0] sm:$0x1] %vm246, %v245
    %s248 = scalar_lea.vmem [#allocation1], 1
    %v249 = vld [vmem:[%s248] sm:$0x1]
    %250 = vrot.lane.b32.xlu0 %v249, 4
    %v251 = vpop.permute.xlu0 %250
    %vm252 = vcmask 64544
    %253 = vst.msk [vmem:[#allocation0] sm:$0x1] %vm252, %v251
    %s255 = smul.u32 1, 2
    %s256 = sshllo.u32 0, %s255
    %s257 = sshrl.u32 %s255, 1
    %v258 = vld [vmem:[#allocation0] sm:%s256]
    %v259 = vpack.c.bf16 0.0, %v258
    %s260 = sshllo.u32 0, %s257
    %261 = vst [vmem:[%s1] sm:%s260] %v259

// kernel: tile.23
$region0: #{tile.23}
  #allocation0 [shape = 's32[1]{0}', space=sflag, size = 0x4, scoped, tag = 'scoped memory for tile.23']
  %s0 = inlined_call_operand.vmem [shape: f32[8], index: 0, kind: input, shape index: {}]
  %s1 = inlined_call_operand.vmem [shape: f32[32,8], index: 1, kind: output, shape index: {}]
  // Predicated region
  $region2: #{tile.23} parent=0 // pred_check
    _
  $region3: #{tile.23} parent=0 // pred_check_branch
    %3 = sbr.rel (0) target = $region5
  $region4: #{tile.23} parent=0 // pred_region
    _
  $region5: #{tile.23} parent=0 // pred_fallthru
    _
  %v4 = vld [vmem:[%s0] ss:$0 sm:$0xff]
  %5 = vst [vmem:[%s1] sm:$0xff] %v4
  %s6 = scalar_lea.vmem %s1, 8
  %7 = vst [vmem:[%s6] sm:$0xff] %v4
  %s8 = scalar_lea.vmem %s1, 16
  %9 = vst [vmem:[%s8] sm:$0xff] %v4
  %s10 = scalar_lea.vmem %s1, 24
  %11 = vst [vmem:[%s10] sm:$0xff] %v4

// kernel: tile.24
$region0: #{tile.24}
  %s0 = inlined_call_operand.vmem [shape: f32[32,8], index: 0, kind: input, shape index: {}]
  %s1 = inlined_call_operand.vmem [shape: f32[1,256], index: 1, kind: output, shape index: {}]
  $region1: #{tile.24} parent=0
    #allocation0 [shape = 'u8[8192]{0}', space=vmem, size = 0x2000, scoped, tag = 'scoped mem for output reshape']
    %s2 = smov 3
    %v3 = vld [vmem:[%s0] ss:$16 sm:%s2]
    %vm4 = vcmask 64512
    %5 = vst.msk [vmem:[#allocation0] ss:$8 sm:$0x3] %vm4, %v3
    %s6 = scalar_lea.vmem %s0, 15
    %s7 = smov 3
    %v8 = vld [vmem:[%s6] ss:$16 sm:%s7]
    %9 = vrot.lane.b32.xlu0 %v8, 120
    %v10 = vpop.permute.xlu0 %9
    %vm11 = vcmask 1048512
    %12 = vst.msk [vmem:[#allocation0] ss:$8 sm:$0x3] %vm11, %v10
    %s13 = scalar_lea.vmem %s0, 14
    %s14 = smov 3
    %v15 = vld [vmem:[%s13] ss:$16 sm:%s14]
    %16 = vrot.lane.b32.xlu0 %v15, 112
    %v17 = vpop.permute.xlu0 %16
    %vm18 = vcmask 982912
    %19 = vst.msk [vmem:[#allocation0] ss:$8 sm:$0x3] %vm18, %v17
    %s20 = scalar_lea.vmem %s0, 13
    %s21 = smov 3
    %v22 = vld [vmem:[%s20] ss:$16 sm:%s21]
    %23 = vrot.lane.b32.xlu0 %v22, 104
    %v24 = vpop.permute.xlu0 %23
    %vm25 = vcmask 917312
    %26 = vst.msk [vmem:[#allocation0] ss:$8 sm:$0x3] %vm25, %v24
    %s27 = scalar_lea.vmem %s0, 12
    %s28 = smov 3
    %v29 = vld [vmem:[%s27] ss:$16 sm:%s28]
    %30 = vrot.lane.b32.xlu0 %v29, 96
    %v31 = vpop.permute.xlu0 %30
    %vm32 = vcmask 851712
    %33 = vst.msk [vmem:[#allocation0] ss:$8 sm:$0x3] %vm32, %v31
    %s34 = scalar_lea.vmem %s0, 11
    %s35 = smov 3
    %v36 = vld [vmem:[%s34] ss:$16 sm:%s35]
    %37 = vrot.lane.b32.xlu0 %v36, 88
    %v38 = vpop.permute.xlu0 %37
    %vm39 = vcmask 786112
    %40 = vst.msk [vmem:[#allocation0] ss:$8 sm:$0x3] %vm39, %v38
    %s41 = scalar_lea.vmem %s0, 10
    %s42 = smov 3
    %v43 = vld [vmem:[%s41] ss:$16 sm:%s42]
    %44 = vrot.lane.b32.xlu0 %v43, 80
    %v45 = vpop.permute.xlu0 %44
    %vm46 = vcmask 720512
    %47 = vst.msk [vmem:[#allocation0] ss:$8 sm:$0x3] %vm46, %v45
    %s48 = scalar_lea.vmem %s0, 9
    %s49 = smov 3
    %v50 = vld [vmem:[%s48] ss:$16 sm:%s49]
    %51 = vrot.lane.b32.xlu0 %v50, 72
    %v52 = vpop.permute.xlu0 %51
    %vm53 = vcmask 654912
    %54 = vst.msk [vmem:[#allocation0] ss:$8 sm:$0x3] %vm53, %v52
    %s55 = scalar_lea.vmem %s0, 8
    %s56 = smov 3
    %v57 = vld [vmem:[%s55] ss:$16 sm:%s56]
    %58 = vrot.lane.b32.xlu0 %v57, 64
    %v59 = vpop.permute.xlu0 %58
    %vm60 = vcmask 589312
    %61 = vst.msk [vmem:[#allocation0] ss:$8 sm:$0x3] %vm60, %v59
    %s62 = scalar_lea.vmem %s0, 7
    %s63 = smov 3
    %v64 = vld [vmem:[%s62] ss:$16 sm:%s63]
    %65 = vrot.lane.b32.xlu0 %v64, 56
    %v66 = vpop.permute.xlu0 %65
    %vm67 = vcmask 523712
    %68 = vst.msk [vmem:[#allocation0] ss:$8 sm:$0x3] %vm67, %v66
    %s69 = scalar_lea.vmem %s0, 6
    %s70 = smov 3
    %v71 = vld [vmem:[%s69] ss:$16 sm:%s70]
    %72 = vrot.lane.b32.xlu0 %v71, 48
    %v73 = vpop.permute.xlu0 %72
    %vm74 = vcmask 458112
    %75 = vst.msk [vmem:[#allocation0] ss:$8 sm:$0x3] %vm74, %v73
    %s76 = scalar_lea.vmem %s0, 5
    %s77 = smov 3
    %v78 = vld [vmem:[%s76] ss:$16 sm:%s77]
    %79 = vrot.lane.b32.xlu0 %v78, 40
    %v80 = vpop.permute.xlu0 %79
    %vm81 = vcmask 392512
    %82 = vst.msk [vmem:[#allocation0] ss:$8 sm:$0x3] %vm81, %v80
    %s83 = scalar_lea.vmem %s0, 4
    %s84 = smov 3
    %v85 = vld [vmem:[%s83] ss:$16 sm:%s84]
    %86 = vrot.lane.b32.xlu0 %v85, 32
    %v87 = vpop.permute.xlu0 %86
    %vm88 = vcmask 326912
    %89 = vst.msk [vmem:[#allocation0] ss:$8 sm:$0x3] %vm88, %v87
    %s90 = scalar_lea.vmem %s0, 3
    %s91 = smov 3
    %v92 = vld [vmem:[%s90] ss:$16 sm:%s91]
    %93 = vrot.lane.b32.xlu0 %v92, 24
    %v94 = vpop.permute.xlu0 %93
    %vm95 = vcmask 261312
    %96 = vst.msk [vmem:[#allocation0] ss:$8 sm:$0x3] %vm95, %v94
    %s97 = scalar_lea.vmem %s0, 2
    %s98 = smov 3
    %v99 = vld [vmem:[%s97] ss:$16 sm:%s98]
    %100 = vrot.lane.b32.xlu0 %v99, 16
    %v101 = vpop.permute.xlu0 %100
    %vm102 = vcmask 195712
    %103 = vst.msk [vmem:[#allocation0] ss:$8 sm:$0x3] %vm102, %v101
    %s104 = scalar_lea.vmem %s0, 1
    %s105 = smov 3
    %v106 = vld [vmem:[%s104] ss:$16 sm:%s105]
    %107 = vrot.lane.b32.xlu0 %v106, 8
    %v108 = vpop.permute.xlu0 %107
    %vm109 = vcmask 130112
    %110 = vst.msk [vmem:[#allocation0] ss:$8 sm:$0x3] %vm109, %v108
    %s112 = sshllo.u32 0, 1
    %v114 = vld [vmem:[#allocation0] sm:%s112]
    %s115 = sshllo.u32 0, 1
    %116 = vst [vmem:[%s1] sm:%s115] %v114
    %s117 = scalar_lea.vmem [#allocation0], 8
    %v118 = vld [vmem:[%s117] sm:%s112]
    %s119 = sshllo.u32 0, 1
    %s120 = scalar_lea.vmem %s1, 1
    %121 = vst [vmem:[%s120] sm:%s119] %v118

// kernel: up_forward.1
$region0: #{up_forward.1}
  #allocation0 [shape = 'u32[]', space=smem, size = 0x4, offset = 0x4, fixed_abs, tag = 'smem constant byte address 0x4 - core index']
  #allocation1 [shape = 'u32[144,128]{1,0:T(1,128)}', space=vmem, size = 0x12000, scoped, tag = 'internal scratch']
  #allocation2 [shape = 'bf16[10,256]{1,0:T(8,128)(2,1)}', space=vmem, size = 0x2000, scoped, tag = 'scratch operand']
  %s0 = inlined_call_operand.vmem [shape: bf16[2,10,65], index: 0, kind: input, shape index: {}]
  %s1 = inlined_call_operand.vmem [shape: bf16[2,10,128], index: 1, kind: input, shape index: {}]
  %s2 = inlined_call_operand.vmem [shape: bf16[3,128,256], index: 2, kind: input, shape index: {}]
  %s3 = inlined_call_operand.vmem [shape: bf16[3,65,256], index: 3, kind: input, shape index: {}]
  %s4 = inlined_call_operand.vmem [shape: f32[1,256], index: 4, kind: input, shape index: {}]
  %s5 = inlined_call_operand.vmem [shape: bf16[3,256,256], index: 5, kind: input, shape index: {}]
  %s6 = inlined_call_operand.vmem [shape: f32[1,256], index: 6, kind: input, shape index: {}]
  %s7 = inlined_call_operand.vmem [shape: f32[2,8,256], index: 7, kind: output, shape index: {}]
  %s8 = sld [smem:[#allocation0]]
  $region61: #{up_forward.1} parent=0
    _
  %s10 = ssub.s32 1, %s8
  %s11 = scalar_select 0, %s10, %s8
  loop: start=0, step=1, limit=4
  $region2: #{up_forward.1} parent=0 // loop_pre_header
    _
  $region3: #{up_forward.1} parent=0 // loop_header
    %s13 = sphi 0, %s17
    %p14 = scmp.ge.s32.totalorder %s13, 4
    %s23 = sphi 0, %s25
    %s26 = sphi 0, %s23
    %s27 = sphi 0, %s26
    %s43 = sphi 0, %s27
    %s49 = sphi 0, %s51
    %s52 = sphi 0, %s49
    %s53 = sphi 0, %s52
    %s69 = sphi 0, %s53
    %s73 = sphi 0, %s73
    %s75 = sphi 0, %s73
    %s76 = sphi 0, %s75
    %s90 = sphi 0, %s76
    %s94 = sphi 0, %s94
    %s96 = sphi 0, %s94
    %s97 = sphi 0, %s96
    %s111 = sphi 0, %s97
    %s115 = sphi 0, %s115
    %s117 = sphi 0, %s115
    %s118 = sphi 0, %s117
    %s132 = sphi 0, %s118
    %s136 = sphi 0, %s136
    %s138 = sphi 0, %s136
    %s139 = sphi 0, %s138
    %s153 = sphi 0, %s139
    %s157 = sphi 0, %s157
    %s159 = sphi 0, %s157
    %s160 = sphi 0, %s159
    %s174 = sphi 0, %s160
    %s180 = sphi 0, %s182
    %s183 = sphi 0, %s180
    %s184 = sphi 0, %s183
    %s200 = sphi 0, %s184
  $region4: #{up_forward.1} parent=0 // loop_header_branch
    %16 = sbr.rel (%p14) target = $region8
  $region5: #{up_forward.1} parent=0 // loop_body
    %s18 = ssub.s32 %s13, 1
    %s19 = ssub.s32 %s13, 2
    %s20 = sadd.s32 %s13, 1
    %s21 = ssub.s32 %s13, %s20
    %p22 = scmp.eq.s32.totalorder %s21, 0
    %s24 = sadd.s32 %s23, 1
    %s25 = scalar_select %p22, %s23, %s24
    %p28 = pneg %p22
    %p29 = scmp.eq.s32.totalorder %s13, 1
    %p30 = por %p28, %p29
    %p31 = scmp.ne.s32.totalorder %s23, %s26
    %p32 = scmp.eq.s32.totalorder %s13, 0
    %p33 = por %p31, %p32
    %p34 = scmp.ne.s32.totalorder %s23, %s26
    %p35 = scmp.eq.s32.totalorder %s18, 1
    %p36 = por %p34, %p35
    %p37 = scmp.ne.s32.totalorder %s26, %s27
    %p38 = scmp.eq.s32.totalorder %s18, 0
    %p39 = por %p37, %p38
    %p40 = scmp.ne.s32.totalorder %s26, %s27
    %p41 = scmp.eq.s32.totalorder %s19, 1
    %p42 = por %p40, %p41
    %p44 = scmp.ne.s32.totalorder %s27, %s43
    %p45 = scmp.eq.s32.totalorder %s19, 0
    %p46 = por %p44, %p45
    %s47 = ssub.s32 %s13, %s20
    %p48 = scmp.eq.s32.totalorder %s47, 0
    %s50 = sadd.s32 %s49, 1
    %s51 = scalar_select %p48, %s49, %s50
    %p54 = pneg %p48
    %p55 = scmp.eq.s32.totalorder %s13, 1
    %p56 = por %p54, %p55
    %p57 = scmp.ne.s32.totalorder %s49, %s52
    %p58 = scmp.eq.s32.totalorder %s13, 0
    %p59 = por %p57, %p58
    %p60 = scmp.ne.s32.totalorder %s49, %s52
    %p61 = scmp.eq.s32.totalorder %s18, 1
    %p62 = por %p60, %p61
    %p63 = scmp.ne.s32.totalorder %s52, %s53
    %p64 = scmp.eq.s32.totalorder %s18, 0
    %p65 = por %p63, %p64
    %p66 = scmp.ne.s32.totalorder %s52, %s53
    %p67 = scmp.eq.s32.totalorder %s19, 1
    %p68 = por %p66, %p67
    %p70 = scmp.ne.s32.totalorder %s53, %s69
    %p71 = scmp.eq.s32.totalorder %s19, 0
    %p72 = por %p70, %p71
    %s74 = sadd.s32 %s73, 1
    %p77 = scmp.eq.s32.totalorder %s13, 1
    %p78 = scmp.ne.s32.totalorder %s73, %s75
    %p79 = scmp.eq.s32.totalorder %s13, 0
    %p80 = por %p78, %p79
    %p81 = scmp.ne.s32.totalorder %s73, %s75
    %p82 = scmp.eq.s32.totalorder %s18, 1
    %p83 = por %p81, %p82
    %p84 = scmp.ne.s32.totalorder %s75, %s76
    %p85 = scmp.eq.s32.totalorder %s18, 0
    %p86 = por %p84, %p85
    %p87 = scmp.ne.s32.totalorder %s75, %s76
    %p88 = scmp.eq.s32.totalorder %s19, 1
    %p89 = por %p87, %p88
    %p91 = scmp.ne.s32.totalorder %s76, %s90
    %p92 = scmp.eq.s32.totalorder %s19, 0
    %p93 = por %p91, %p92
    %s95 = sadd.s32 %s94, 1
    %p98 = scmp.eq.s32.totalorder %s13, 1
    %p99 = scmp.ne.s32.totalorder %s94, %s96
    %p100 = scmp.eq.s32.totalorder %s13, 0
    %p101 = por %p99, %p100
    %p102 = scmp.ne.s32.totalorder %s94, %s96
    %p103 = scmp.eq.s32.totalorder %s18, 1
    %p104 = por %p102, %p103
    %p105 = scmp.ne.s32.totalorder %s96, %s97
    %p106 = scmp.eq.s32.totalorder %s18, 0
    %p107 = por %p105, %p106
    %p108 = scmp.ne.s32.totalorder %s96, %s97
    %p109 = scmp.eq.s32.totalorder %s19, 1
    %p110 = por %p108, %p109
    %p112 = scmp.ne.s32.totalorder %s97, %s111
    %p113 = scmp.eq.s32.totalorder %s19, 0
    %p114 = por %p112, %p113
    %s116 = sadd.s32 %s115, 1
    %p119 = scmp.eq.s32.totalorder %s13, 1
    %p120 = scmp.ne.s32.totalorder %s115, %s117
    %p121 = scmp.eq.s32.totalorder %s13, 0
    %p122 = por %p120, %p121
    %p123 = scmp.ne.s32.totalorder %s115, %s117
    %p124 = scmp.eq.s32.totalorder %s18, 1
    %p125 = por %p123, %p124
    %p126 = scmp.ne.s32.totalorder %s117, %s118
    %p127 = scmp.eq.s32.totalorder %s18, 0
    %p128 = por %p126, %p127
    %p129 = scmp.ne.s32.totalorder %s117, %s118
    %p130 = scmp.eq.s32.totalorder %s19, 1
    %p131 = por %p129, %p130
    %p133 = scmp.ne.s32.totalorder %s118, %s132
    %p134 = scmp.eq.s32.totalorder %s19, 0
    %p135 = por %p133, %p134
    %s137 = sadd.s32 %s136, 1
    %p140 = scmp.eq.s32.totalorder %s13, 1
    %p141 = scmp.ne.s32.totalorder %s136, %s138
    %p142 = scmp.eq.s32.totalorder %s13, 0
    %p143 = por %p141, %p142
    %p144 = scmp.ne.s32.totalorder %s136, %s138
    %p145 = scmp.eq.s32.totalorder %s18, 1
    %p146 = por %p144, %p145
    %p147 = scmp.ne.s32.totalorder %s138, %s139
    %p148 = scmp.eq.s32.totalorder %s18, 0
    %p149 = por %p147, %p148
    %p150 = scmp.ne.s32.totalorder %s138, %s139
    %p151 = scmp.eq.s32.totalorder %s19, 1
    %p152 = por %p150, %p151
    %p154 = scmp.ne.s32.totalorder %s139, %s153
    %p155 = scmp.eq.s32.totalorder %s19, 0
    %p156 = por %p154, %p155
    %s158 = sadd.s32 %s157, 1
    %p161 = scmp.eq.s32.totalorder %s13, 1
    %p162 = scmp.ne.s32.totalorder %s157, %s159
    %p163 = scmp.eq.s32.totalorder %s13, 0
    %p164 = por %p162, %p163
    %p165 = scmp.ne.s32.totalorder %s157, %s159
    %p166 = scmp.eq.s32.totalorder %s18, 1
    %p167 = por %p165, %p166
    %p168 = scmp.ne.s32.totalorder %s159, %s160
    %p169 = scmp.eq.s32.totalorder %s18, 0
    %p170 = por %p168, %p169
    %p171 = scmp.ne.s32.totalorder %s159, %s160
    %p172 = scmp.eq.s32.totalorder %s19, 1
    %p173 = por %p171, %p172
    %p175 = scmp.ne.s32.totalorder %s160, %s174
    %p176 = scmp.eq.s32.totalorder %s19, 0
    %p177 = por %p175, %p176
    %s178 = ssub.s32 %s13, %s20
    %p179 = scmp.eq.s32.totalorder %s178, 0
    %s181 = sadd.s32 %s180, 1
    %s182 = scalar_select %p179, %s180, %s181
    %p185 = pneg %p179
    %p186 = scmp.eq.s32.totalorder %s13, 1
    %p187 = por %p185, %p186
    %p188 = scmp.ne.s32.totalorder %s180, %s183
    %p189 = scmp.eq.s32.totalorder %s13, 0
    %p190 = por %p188, %p189
    %p191 = scmp.ne.s32.totalorder %s180, %s183
    %p192 = scmp.eq.s32.totalorder %s18, 1
    %p193 = por %p191, %p192
    %p194 = scmp.ne.s32.totalorder %s183, %s184
    %p195 = scmp.eq.s32.totalorder %s18, 0
    %p196 = por %p194, %p195
    %p197 = scmp.ne.s32.totalorder %s183, %s184
    %p198 = scmp.eq.s32.totalorder %s19, 1
    %p199 = por %p197, %p198
    %p201 = scmp.ne.s32.totalorder %s184, %s200
    %p202 = scmp.eq.s32.totalorder %s19, 0
    %p203 = por %p201, %p202
    %p204 = scmp.le.s32.totalorder 1, %s13
    %p205 = scmp.lt.s32.totalorder %s13, 3
    %p206 = pnand %p204, %p205
    %p207 = pneg %p206
    // Predicated region
    $region9: #{up_forward.1} parent=5 // pred_check
      _
    $region10: #{up_forward.1} parent=5 // pred_check_branch
      %209 = sbr.rel (%p206) target = $region12
    $region11: #{up_forward.1} parent=5 // pred_region
      %s210 = ssub.s32 %s13, 1
      // Predicated region
      $region13: #{up_forward.1} parent=11 // pred_check
        %p211 = pneg %p86
      $region14: #{up_forward.1} parent=11 // pred_check_branch
        %213 = sbr.rel (%p211) target = $region16
      $region15: #{up_forward.1} parent=11 // pred_region
        _
      $region16: #{up_forward.1} parent=11 // pred_fallthru
        _
      // Predicated region
      $region17: #{up_forward.1} parent=11 // pred_check
        %p214 = pneg %p107
      $region18: #{up_forward.1} parent=11 // pred_check_branch
        %216 = sbr.rel (%p214) target = $region20
      $region19: #{up_forward.1} parent=11 // pred_region
        _
      $region20: #{up_forward.1} parent=11 // pred_fallthru
        _
      // Predicated region
      $region21: #{up_forward.1} parent=11 // pred_check
        %p217 = pneg %p128
      $region22: #{up_forward.1} parent=11 // pred_check_branch
        %219 = sbr.rel (%p217) target = $region24
      $region23: #{up_forward.1} parent=11 // pred_region
        _
      $region24: #{up_forward.1} parent=11 // pred_fallthru
        _
      // Predicated region
      $region25: #{up_forward.1} parent=11 // pred_check
        %p220 = pneg %p149
      $region26: #{up_forward.1} parent=11 // pred_check_branch
        %222 = sbr.rel (%p220) target = $region28
      $region27: #{up_forward.1} parent=11 // pred_region
        _
      $region28: #{up_forward.1} parent=11 // pred_fallthru
        _
      // Predicated region
      $region29: #{up_forward.1} parent=11 // pred_check
        %p223 = pneg %p170
      $region30: #{up_forward.1} parent=11 // pred_check_branch
        %225 = sbr.rel (%p223) target = $region32
      $region31: #{up_forward.1} parent=11 // pred_region
        _
      $region32: #{up_forward.1} parent=11 // pred_fallthru
        _
    $region12: #{up_forward.1} parent=5 // pred_fallthru
      _
    %p226 = scmp.lt.s32.totalorder %s13, 2
    // Predicated region
    $region33: #{up_forward.1} parent=5 // pred_check
      %p227 = pneg %p226
    $region34: #{up_forward.1} parent=5 // pred_check_branch
      %229 = sbr.rel (%p227) target = $region36
    $region35: #{up_forward.1} parent=5 // pred_region
      // Predicated region
      $region37: #{up_forward.1} parent=35 // pred_check
        %p230 = pneg %p33
      $region38: #{up_forward.1} parent=35 // pred_check_branch
        %232 = sbr.rel (%p230) target = $region40
      $region39: #{up_forward.1} parent=35 // pred_region
        %p233 = scmp.lt.s32.totalorder %s13, 1
        %s234 = scalar_select %p233, %s13, 1
        %s235 = smul.addr %s234, 2
        %s236 = smul.addr %s235, 4
        %s237 = scalar_lea.vmem %s0, %s236
      $region40: #{up_forward.1} parent=35 // pred_fallthru
        _
      // Predicated region
      $region41: #{up_forward.1} parent=35 // pred_check
        %p238 = pneg %p59
      $region42: #{up_forward.1} parent=35 // pred_check_branch
        %240 = sbr.rel (%p238) target = $region44
      $region43: #{up_forward.1} parent=35 // pred_region
        %p241 = scmp.lt.s32.totalorder %s13, 1
        %s242 = scalar_select %p241, %s13, 1
        %s243 = smul.addr %s242, 2
        %s244 = smul.addr %s243, 4
        %s245 = scalar_lea.vmem %s1, %s244
      $region44: #{up_forward.1} parent=35 // pred_fallthru
        _
    $region36: #{up_forward.1} parent=5 // pred_fallthru
      _
    %p246 = scmp.le.s32.totalorder 1, %s13
    %p247 = scmp.lt.s32.totalorder %s13, 3
    %p248 = pnand %p246, %p247
    %p249 = pneg %p248
    // Predicated region
    $region45: #{up_forward.1} parent=5 // pred_check
      _
    $region46: #{up_forward.1} parent=5 // pred_check_branch
      %251 = sbr.rel (%p248) target = $region48
    $region47: #{up_forward.1} parent=5 // pred_region
      %s252 = ssub.s32 %s13, 1
      %p253 = scmp.lt.s32.totalorder %s18, 1
      %s254 = scalar_select %p253, %s18, 1
      %s255 = smul.addr %s254, 2
      %s256 = smul.addr %s255, 4
      %s257 = scalar_lea.vmem %s0, %s256
      %p258 = pneg %p39
      %p259 = pneg %p36
      %p260 = scmp.lt.s32.totalorder %s18, 1
      %s261 = scalar_select %p260, %s18, 1
      %s262 = smul.addr %s261, 2
      %s263 = smul.addr %s262, 4
      %s264 = scalar_lea.vmem %s1, %s263
      %p265 = pneg %p65
      %p266 = pneg %p62
      %p267 = pneg %p86
      %p268 = pneg %p83
      %p269 = pneg %p107
      %p270 = pneg %p104
      %p271 = pneg %p128
      %p272 = pneg %p125
      %p273 = pneg %p149
      %p274 = pneg %p146
      %p275 = pneg %p170
      %p276 = pneg %p167
      %p277 = pneg %p196
      %p278 = pneg %p193
      %p279 = scmp.lt.s32.totalorder %s18, 1
      %s280 = scalar_select %p279, %s18, 1
      %s281 = smul.addr %s280, 2
      %s282 = smul.addr %s281, 8
      %s283 = scalar_lea.vmem %s7, %s282
      %p284 = scmp.lt.s32.totalorder %s18, 1
      %s285 = scalar_select %p284, %s18, 1
      %s286 = smul.addr %s285, 2
      %s287 = smul.addr %s286, 4
      %s288 = scalar_lea.vmem %s0, %s287
      %p289 = scmp.lt.s32.totalorder %s18, 1
      %s290 = scalar_select %p289, %s18, 1
      %s291 = smul.addr %s290, 2
      %s292 = smul.addr %s291, 4
      %s293 = scalar_lea.vmem %s1, %s292
      %p294 = scmp.lt.s32.totalorder %s18, 1
      %s295 = scalar_select %p294, %s18, 1
      %s296 = smul.addr %s295, 2
      %s297 = smul.addr %s296, 8
      %s298 = scalar_lea.vmem %s7, %s297
      %v300 = vld [vmem:[%s293] sm:$0xf]
      %v301 = vld [vmem:[%s2] sm:$0xff]
      %v302 = vld [vmem:[%s2 + $0x8] sm:$0xff]
      %v303 = vld [vmem:[%s2 + $0x10] sm:$0xff]
      %v304 = vld [vmem:[%s2 + $0x18] sm:$0xff]
      %v305 = vld [vmem:[%s2 + $0x20] sm:$0xff]
      %v306 = vld [vmem:[%s2 + $0x28] sm:$0xff]
      %v307 = vld [vmem:[%s2 + $0x30] sm:$0xff]
      %v308 = vld [vmem:[%s2 + $0x38] sm:$0xff]
      %v309 = vld [vmem:[%s2 + $0x40] sm:$0xff]
      %v310 = vld [vmem:[%s2 + $0x48] sm:$0xff]
      %v311 = vld [vmem:[%s2 + $0x50] sm:$0xff]
      %v312 = vld [vmem:[%s2 + $0x58] sm:$0xff]
      %v313 = vld [vmem:[%s2 + $0x60] sm:$0xff]
      %v314 = vld [vmem:[%s2 + $0x68] sm:$0xff]
      %v315 = vld [vmem:[%s2 + $0x70] sm:$0xff]
      %v316 = vld [vmem:[%s2 + $0x78] sm:$0xff]
      %v317 = vld [vmem:[%s288] sm:$0xf]
      %v318 = vld [vmem:[%s3] sm:$0xff]
      %v319 = vld [vmem:[%s3 + $0x8] sm:$0xff]
      %v320 = vld [vmem:[%s3 + $0x10] sm:$0xff]
      %v321 = vld [vmem:[%s3 + $0x18] sm:$0xff]
      %v322 = vld [vmem:[%s3 + $0x20] sm:$0xff]
      %v323 = vld [vmem:[%s3 + $0x28] sm:$0xff]
      %v324 = vld [vmem:[%s3 + $0x30] sm:$0xff]
      %v325 = vld [vmem:[%s3 + $0x38] sm:$0xff]
      %v326 = vld [vmem:[%s3 + $0x40] sm:$0x11]
      %v336 = vunpack.c.l.b16 %v318
      %v337 = vunpack.c.h.b16 %v318
      %v338 = vunpack.c.l.b16 %v319
      %v339 = vunpack.c.h.b16 %v319
      %v340 = vunpack.c.l.b16 %v320
      %v341 = vunpack.c.h.b16 %v320
      %v342 = vunpack.c.l.b16 %v321
      %v343 = vunpack.c.h.b16 %v321
      %v344 = vunpack.c.l.b16 %v322
      %v345 = vunpack.c.h.b16 %v322
      %v346 = vunpack.c.l.b16 %v323
      %v347 = vunpack.c.h.b16 %v323
      %v348 = vunpack.c.l.b16 %v324
      %v349 = vunpack.c.h.b16 %v324
      %v350 = vunpack.c.l.b16 %v325
      %v351 = vunpack.c.h.b16 %v325
      %v352 = vunpack.c.l.b16 %v326
      %v353 = vunpack.c.h.b16 %v326
      %v354 = vpack.c.b16 %v338, %v336
      %v355 = vpack.c.b16 %v339, %v337
      %v356 = vpack.c.b16 %v342, %v340
      %v357 = vpack.c.b16 %v343, %v341
      %v358 = vpack.c.b16 %v346, %v344
      %v359 = vpack.c.b16 %v347, %v345
      %v360 = vpack.c.b16 %v350, %v348
      %v361 = vpack.c.b16 %v351, %v349
      %v362 = vpack.c.b16 %v352, %v352
      %v363 = vpack.c.b16 %v353, %v353
      %vm372 = vcmask 531456
      %v374 = vsel %vm372, %v317, 0
      %vm376 = vcmask 1040384
      %v377 = vsel 0, 4294967295, 65535
      %v378 = vsel %vm376, %v377, 0
      %v380 = vand.u32 %v362, %v378
      %v383 = vand.u32 %v363, %v378
      %385 = vmatprep.subr.bf16.mxu0 %v355
      %386 = vmatpush1.bf16.msra.mxu0 %v354
      %387 = vmatprep.subr.bf16.mxu0 %v357
      %388 = vmatpush1.bf16.msra.mxu0 %v356
      %389 = vmatprep.subr.bf16.mxu0 %v359
      %390 = vmatpush1.bf16.msra.mxu0 %v358
      %391 = vmatprep.subr.bf16.mxu0 %v361
      %392 = vmatpush1.bf16.msra.mxu0 %v360
      %393 = vmatprep.subr.bf16.mxu0 %v383
      %394 = vmatpush1.bf16.msra.mxu0 %v380
      %395 = vmatprep.subr.bf16.mxu0 0
      %396 = vmatpush1.bf16.msra.mxu0 0
      %397 = vmatprep.subr.bf16.mxu0 0
      %398 = vmatpush1.bf16.msra.mxu0 0
      %399 = vmatprep.subr.bf16.mxu0 0
      %400 = vmatpush1.bf16.msra.mxu0 0
      %401 = vmatprep.subr.bf16.mxu0 0
      %402 = vmatpush1.bf16.msra.mxu0 0
      %403 = vmatprep.subr.bf16.mxu0 0
      %404 = vmatpush1.bf16.msra.mxu0 0
      %405 = vmatprep.subr.bf16.mxu0 0
      %406 = vmatpush1.bf16.msra.mxu0 0
      %407 = vmatprep.subr.bf16.mxu0 0
      %408 = vmatpush1.bf16.msra.mxu0 0
      %409 = vmatprep.subr.bf16.mxu0 0
      %410 = vmatpush1.bf16.msra.mxu0 0
      %411 = vmatprep.subr.bf16.mxu0 0
      %412 = vmatpush1.bf16.msra.mxu0 0
      %413 = vmatprep.subr.bf16.mxu0 0
      %414 = vmatpush1.bf16.msra.mxu0 0
      %415 = vmatprep.subr.bf16.mxu0 0
      %416 = vmatpush1.bf16.msra.mxu0 0
      %417 = vmatprep.mubr.bf16.mxu0 0
      %418 = vmatmul.mubr.bf16.gmra.mrb[0].mxu0 %v374
      %v419 = vpop.f32.mrb[0].mxu0
      %v420 = vadd.f32 0.0, %v419
      %v421 = vpop.f32.mrb[0].mxu0
      %v422 = vadd.f32 0.0, %v421
      %v423 = vpop.f32.mrb[0].mxu0
      %v424 = vpop.f32.mrb[0].mxu0
      %425 = vdwg.mxu0
      %v442 = vunpack.c.l.b16 %v301
      %v443 = vunpack.c.h.b16 %v301
      %v444 = vunpack.c.l.b16 %v302
      %v445 = vunpack.c.h.b16 %v302
      %v446 = vunpack.c.l.b16 %v303
      %v447 = vunpack.c.h.b16 %v303
      %v448 = vunpack.c.l.b16 %v304
      %v449 = vunpack.c.h.b16 %v304
      %v450 = vunpack.c.l.b16 %v305
      %v451 = vunpack.c.h.b16 %v305
      %v452 = vunpack.c.l.b16 %v306
      %v453 = vunpack.c.h.b16 %v306
      %v454 = vunpack.c.l.b16 %v307
      %v455 = vunpack.c.h.b16 %v307
      %v456 = vunpack.c.l.b16 %v308
      %v457 = vunpack.c.h.b16 %v308
      %v458 = vunpack.c.l.b16 %v309
      %v459 = vunpack.c.h.b16 %v309
      %v460 = vunpack.c.l.b16 %v310
      %v461 = vunpack.c.h.b16 %v310
      %v462 = vunpack.c.l.b16 %v311
      %v463 = vunpack.c.h.b16 %v311
      %v464 = vunpack.c.l.b16 %v312
      %v465 = vunpack.c.h.b16 %v312
      %v466 = vunpack.c.l.b16 %v313
      %v467 = vunpack.c.h.b16 %v313
      %v468 = vunpack.c.l.b16 %v314
      %v469 = vunpack.c.h.b16 %v314
      %v470 = vunpack.c.l.b16 %v315
      %v471 = vunpack.c.h.b16 %v315
      %v472 = vunpack.c.l.b16 %v316
      %v473 = vunpack.c.h.b16 %v316
      %v474 = vpack.c.b16 %v444, %v442
      %v475 = vpack.c.b16 %v445, %v443
      %v476 = vpack.c.b16 %v448, %v446
      %v477 = vpack.c.b16 %v449, %v447
      %v478 = vpack.c.b16 %v452, %v450
      %v479 = vpack.c.b16 %v453, %v451
      %v480 = vpack.c.b16 %v456, %v454
      %v481 = vpack.c.b16 %v457, %v455
      %v482 = vpack.c.b16 %v460, %v458
      %v483 = vpack.c.b16 %v461, %v459
      %v484 = vpack.c.b16 %v464, %v462
      %v485 = vpack.c.b16 %v465, %v463
      %v486 = vpack.c.b16 %v468, %v466
      %v487 = vpack.c.b16 %v469, %v467
      %v488 = vpack.c.b16 %v472, %v470
      %v489 = vpack.c.b16 %v473, %v471
      %506 = vmatprep.subr.bf16.mxu0 %v475
      %507 = vmatpush1.bf16.msra.mxu0 %v474
      %508 = vmatprep.subr.bf16.mxu0 %v477
      %509 = vmatpush1.bf16.msra.mxu0 %v476
      %510 = vmatprep.subr.bf16.mxu0 %v479
      %511 = vmatpush1.bf16.msra.mxu0 %v478
      %512 = vmatprep.subr.bf16.mxu0 %v481
      %513 = vmatpush1.bf16.msra.mxu0 %v480
      %514 = vmatprep.subr.bf16.mxu0 %v483
      %515 = vmatpush1.bf16.msra.mxu0 %v482
      %516 = vmatprep.subr.bf16.mxu0 %v485
      %517 = vmatpush1.bf16.msra.mxu0 %v484
      %518 = vmatprep.subr.bf16.mxu0 %v487
      %519 = vmatpush1.bf16.msra.mxu0 %v486
      %520 = vmatprep.subr.bf16.mxu0 %v489
      %521 = vmatpush1.bf16.msra.mxu0 %v488
      %522 = vmatprep.subr.bf16.mxu0 0
      %523 = vmatpush1.bf16.msra.mxu0 0
      %524 = vmatprep.subr.bf16.mxu0 0
      %525 = vmatpush1.bf16.msra.mxu0 0
      %526 = vmatprep.subr.bf16.mxu0 0
      %527 = vmatpush1.bf16.msra.mxu0 0
      %528 = vmatprep.subr.bf16.mxu0 0
      %529 = vmatpush1.bf16.msra.mxu0 0
      %530 = vmatprep.subr.bf16.mxu0 0
      %531 = vmatpush1.bf16.msra.mxu0 0
      %532 = vmatprep.subr.bf16.mxu0 0
      %533 = vmatpush1.bf16.msra.mxu0 0
      %534 = vmatprep.subr.bf16.mxu0 0
      %535 = vmatpush1.bf16.msra.mxu0 0
      %536 = vmatprep.subr.bf16.mxu0 0
      %537 = vmatpush1.bf16.msra.mxu0 0
      %538 = vmatprep.mubr.bf16.mxu0 0
      %539 = vmatmul.mubr.bf16.gmra.mrb[0].mxu0 %v300
      %v540 = vpop.f32.mrb[0].mxu0
      %v541 = vadd.f32 %v420, %v540
      %v542 = vpop.f32.mrb[0].mxu0
      %v543 = vadd.f32 %v422, %v542
      %v544 = vpop.f32.mrb[0].mxu0
      %v545 = vpop.f32.mrb[0].mxu0
      %546 = vdwg.mxu0
      %v547 = vld [vmem:[%s293] sm:$0xf]
      %v548 = vld [vmem:[%s293 + $0x4] sm:$0x1]
      %s549 = scalar_lea.vmem %s2, 128
      %v550 = vld [vmem:[%s549] sm:$0xff]
      %v551 = vld [vmem:[%s549 + $0x8] sm:$0xff]
      %v552 = vld [vmem:[%s549 + $0x10] sm:$0xff]
      %v553 = vld [vmem:[%s549 + $0x18] sm:$0xff]
      %v554 = vld [vmem:[%s549 + $0x20] sm:$0xff]
      %v555 = vld [vmem:[%s549 + $0x28] sm:$0xff]
      %v556 = vld [vmem:[%s549 + $0x30] sm:$0xff]
      %v557 = vld [vmem:[%s549 + $0x38] sm:$0xff]
      %v558 = vld [vmem:[%s549 + $0x40] sm:$0xff]
      %v559 = vld [vmem:[%s549 + $0x48] sm:$0xff]
      %v560 = vld [vmem:[%s549 + $0x50] sm:$0xff]
      %v561 = vld [vmem:[%s549 + $0x58] sm:$0xff]
      %v562 = vld [vmem:[%s549 + $0x60] sm:$0xff]
      %v563 = vld [vmem:[%s549 + $0x68] sm:$0xff]
      %v564 = vld [vmem:[%s549 + $0x70] sm:$0xff]
      %v565 = vld [vmem:[%s549 + $0x78] sm:$0xff]
      %v568 = vunpack.c.l.b16 %v547
      %v569 = vunpack.c.l.b16 %v548
      %v570 = vpack.c.b16 %v569, %v568
      %v572 = vshrl.u32 %v570, 16
      %v574 = vshll.u32 %v570, 16
      %v576 = vrot.slane %v574, 1
      %v577 = vor.u32 %v572, %v576
      %v595 = vunpack.c.l.b16 %v550
      %v596 = vunpack.c.h.b16 %v550
      %v597 = vunpack.c.l.b16 %v551
      %v598 = vunpack.c.h.b16 %v551
      %v599 = vunpack.c.l.b16 %v552
      %v600 = vunpack.c.h.b16 %v552
      %v601 = vunpack.c.l.b16 %v553
      %v602 = vunpack.c.h.b16 %v553
      %v603 = vunpack.c.l.b16 %v554
      %v604 = vunpack.c.h.b16 %v554
      %v605 = vunpack.c.l.b16 %v555
      %v606 = vunpack.c.h.b16 %v555
      %v607 = vunpack.c.l.b16 %v556
      %v608 = vunpack.c.h.b16 %v556
      %v609 = vunpack.c.l.b16 %v557
      %v610 = vunpack.c.h.b16 %v557
      %v611 = vunpack.c.l.b16 %v558
      %v612 = vunpack.c.h.b16 %v558
      %v613 = vunpack.c.l.b16 %v559
      %v614 = vunpack.c.h.b16 %v559
      %v615 = vunpack.c.l.b16 %v560
      %v616 = vunpack.c.h.b16 %v560
      %v617 = vunpack.c.l.b16 %v561
      %v618 = vunpack.c.h.b16 %v561
      %v619 = vunpack.c.l.b16 %v562
      %v620 = vunpack.c.h.b16 %v562
      %v621 = vunpack.c.l.b16 %v563
      %v622 = vunpack.c.h.b16 %v563
      %v623 = vunpack.c.l.b16 %v564
      %v624 = vunpack.c.h.b16 %v564
      %v625 = vunpack.c.l.b16 %v565
      %v626 = vunpack.c.h.b16 %v565
      %v627 = vpack.c.b16 %v597, %v595
      %v628 = vpack.c.b16 %v598, %v596
      %v629 = vpack.c.b16 %v601, %v599
      %v630 = vpack.c.b16 %v602, %v600
      %v631 = vpack.c.b16 %v605, %v603
      %v632 = vpack.c.b16 %v606, %v604
      %v633 = vpack.c.b16 %v609, %v607
      %v634 = vpack.c.b16 %v610, %v608
      %v635 = vpack.c.b16 %v613, %v611
      %v636 = vpack.c.b16 %v614, %v612
      %v637 = vpack.c.b16 %v617, %v615
      %v638 = vpack.c.b16 %v618, %v616
      %v639 = vpack.c.b16 %v621, %v619
      %v640 = vpack.c.b16 %v622, %v620
      %v641 = vpack.c.b16 %v625, %v623
      %v642 = vpack.c.b16 %v626, %v624
      %659 = vmatprep.subr.bf16.mxu0 %v628
      %660 = vmatpush1.bf16.msra.mxu0 %v627
      %661 = vmatprep.subr.bf16.mxu0 %v630
      %662 = vmatpush1.bf16.msra.mxu0 %v629
      %663 = vmatprep.subr.bf16.mxu0 %v632
      %664 = vmatpush1.bf16.msra.mxu0 %v631
      %665 = vmatprep.subr.bf16.mxu0 %v634
      %666 = vmatpush1.bf16.msra.mxu0 %v633
      %667 = vmatprep.subr.bf16.mxu0 %v636
      %668 = vmatpush1.bf16.msra.mxu0 %v635
      %669 = vmatprep.subr.bf16.mxu0 %v638
      %670 = vmatpush1.bf16.msra.mxu0 %v637
      %671 = vmatprep.subr.bf16.mxu0 %v640
      %672 = vmatpush1.bf16.msra.mxu0 %v639
      %673 = vmatprep.subr.bf16.mxu0 %v642
      %674 = vmatpush1.bf16.msra.mxu0 %v641
      %675 = vmatprep.subr.bf16.mxu0 0
      %676 = vmatpush1.bf16.msra.mxu0 0
      %677 = vmatprep.subr.bf16.mxu0 0
      %678 = vmatpush1.bf16.msra.mxu0 0
      %679 = vmatprep.subr.bf16.mxu0 0
      %680 = vmatpush1.bf16.msra.mxu0 0
      %681 = vmatprep.subr.bf16.mxu0 0
      %682 = vmatpush1.bf16.msra.mxu0 0
      %683 = vmatprep.subr.bf16.mxu0 0
      %684 = vmatpush1.bf16.msra.mxu0 0
      %685 = vmatprep.subr.bf16.mxu0 0
      %686 = vmatpush1.bf16.msra.mxu0 0
      %687 = vmatprep.subr.bf16.mxu0 0
      %688 = vmatpush1.bf16.msra.mxu0 0
      %689 = vmatprep.subr.bf16.mxu0 0
      %690 = vmatpush1.bf16.msra.mxu0 0
      %691 = vmatprep.mubr.bf16.mxu0 0
      %692 = vmatmul.mubr.bf16.gmra.mrb[0].mxu0 %v577
      %v693 = vpop.f32.mrb[0].mxu0
      %v694 = vadd.f32 0.0, %v693
      %v695 = vpop.f32.mrb[0].mxu0
      %v696 = vadd.f32 0.0, %v695
      %v697 = vpop.f32.mrb[0].mxu0
      %v698 = vpop.f32.mrb[0].mxu0
      %699 = vdwg.mxu0
      %v700 = vadd.f32 %v541, %v694
      %v701 = vadd.f32 %v543, %v696
      %v702 = vld [vmem:[%s288] sm:$0xf]
      %v703 = vld [vmem:[%s288 + $0x4] sm:$0x1]
      %s704 = scalar_lea.vmem %s3, 72
      %v705 = vld [vmem:[%s704] sm:$0xff]
      %v706 = vld [vmem:[%s704 + $0x8] sm:$0xff]
      %v707 = vld [vmem:[%s704 + $0x10] sm:$0xff]
      %v708 = vld [vmem:[%s704 + $0x18] sm:$0xff]
      %v709 = vld [vmem:[%s704 + $0x20] sm:$0xff]
      %v710 = vld [vmem:[%s704 + $0x28] sm:$0xff]
      %v711 = vld [vmem:[%s704 + $0x30] sm:$0xff]
      %v712 = vld [vmem:[%s704 + $0x38] sm:$0xff]
      %v713 = vld [vmem:[%s704 + $0x40] sm:$0x11]
      %v716 = vunpack.c.l.b16 %v702
      %v717 = vunpack.c.l.b16 %v703
      %v718 = vpack.c.b16 %v717, %v716
      %v720 = vshrl.u32 %v718, 16
      %v722 = vshll.u32 %v718, 16
      %v724 = vrot.slane %v722, 1
      %v725 = vor.u32 %v720, %v724
      %v735 = vunpack.c.l.b16 %v705
      %v736 = vunpack.c.h.b16 %v705
      %v737 = vunpack.c.l.b16 %v706
      %v738 = vunpack.c.h.b16 %v706
      %v739 = vunpack.c.l.b16 %v707
      %v740 = vunpack.c.h.b16 %v707
      %v741 = vunpack.c.l.b16 %v708
      %v742 = vunpack.c.h.b16 %v708
      %v743 = vunpack.c.l.b16 %v709
      %v744 = vunpack.c.h.b16 %v709
      %v745 = vunpack.c.l.b16 %v710
      %v746 = vunpack.c.h.b16 %v710
      %v747 = vunpack.c.l.b16 %v711
      %v748 = vunpack.c.h.b16 %v711
      %v749 = vunpack.c.l.b16 %v712
      %v750 = vunpack.c.h.b16 %v712
      %v751 = vunpack.c.l.b16 %v713
      %v752 = vunpack.c.h.b16 %v713
      %v753 = vpack.c.b16 %v737, %v735
      %v754 = vpack.c.b16 %v738, %v736
      %v755 = vpack.c.b16 %v741, %v739
      %v756 = vpack.c.b16 %v742, %v740
      %v757 = vpack.c.b16 %v745, %v743
      %v758 = vpack.c.b16 %v746, %v744
      %v759 = vpack.c.b16 %v749, %v747
      %v760 = vpack.c.b16 %v750, %v748
      %v761 = vpack.c.b16 %v751, %v751
      %v762 = vpack.c.b16 %v752, %v752
      %v772 = vsel %vm372, %v725, 0
      %v775 = vand.u32 %v761, %v378
      %v778 = vand.u32 %v762, %v378
      %780 = vmatprep.subr.bf16.mxu0 %v754
      %781 = vmatpush1.bf16.msra.mxu0 %v753
      %782 = vmatprep.subr.bf16.mxu0 %v756
      %783 = vmatpush1.bf16.msra.mxu0 %v755
      %784 = vmatprep.subr.bf16.mxu0 %v758
      %785 = vmatpush1.bf16.msra.mxu0 %v757
      %786 = vmatprep.subr.bf16.mxu0 %v760
      %787 = vmatpush1.bf16.msra.mxu0 %v759
      %788 = vmatprep.subr.bf16.mxu0 %v778
      %789 = vmatpush1.bf16.msra.mxu0 %v775
      %790 = vmatprep.subr.bf16.mxu0 0
      %791 = vmatpush1.bf16.msra.mxu0 0
      %792 = vmatprep.subr.bf16.mxu0 0
      %793 = vmatpush1.bf16.msra.mxu0 0
      %794 = vmatprep.subr.bf16.mxu0 0
      %795 = vmatpush1.bf16.msra.mxu0 0
      %796 = vmatprep.subr.bf16.mxu0 0
      %797 = vmatpush1.bf16.msra.mxu0 0
      %798 = vmatprep.subr.bf16.mxu0 0
      %799 = vmatpush1.bf16.msra.mxu0 0
      %800 = vmatprep.subr.bf16.mxu0 0
      %801 = vmatpush1.bf16.msra.mxu0 0
      %802 = vmatprep.subr.bf16.mxu0 0
      %803 = vmatpush1.bf16.msra.mxu0 0
      %804 = vmatprep.subr.bf16.mxu0 0
      %805 = vmatpush1.bf16.msra.mxu0 0
      %806 = vmatprep.subr.bf16.mxu0 0
      %807 = vmatpush1.bf16.msra.mxu0 0
      %808 = vmatprep.subr.bf16.mxu0 0
      %809 = vmatpush1.bf16.msra.mxu0 0
      %810 = vmatprep.subr.bf16.mxu0 0
      %811 = vmatpush1.bf16.msra.mxu0 0
      %812 = vmatprep.mubr.bf16.mxu0 0
      %813 = vmatmul.mubr.bf16.gmra.mrb[0].mxu0 %v772
      %v814 = vpop.f32.mrb[0].mxu0
      %v815 = vadd.f32 0.0, %v814
      %v816 = vpop.f32.mrb[0].mxu0
      %v817 = vadd.f32 0.0, %v816
      %v818 = vpop.f32.mrb[0].mxu0
      %v819 = vpop.f32.mrb[0].mxu0
      %820 = vdwg.mxu0
      %v821 = vadd.f32 %v700, %v815
      %v822 = vadd.f32 %v701, %v817
      %v823 = vld [vmem:[%s293] sm:$0xe]
      %s824 = scalar_lea.vmem %s2, 256
      %v825 = vld [vmem:[%s824] sm:$0xff]
      %v826 = vld [vmem:[%s824 + $0x8] sm:$0xff]
      %v827 = vld [vmem:[%s824 + $0x10] sm:$0xff]
      %v828 = vld [vmem:[%s824 + $0x18] sm:$0xff]
      %v829 = vld [vmem:[%s824 + $0x20] sm:$0xff]
      %v830 = vld [vmem:[%s824 + $0x28] sm:$0xff]
      %v831 = vld [vmem:[%s824 + $0x30] sm:$0xff]
      %v832 = vld [vmem:[%s824 + $0x38] sm:$0xff]
      %v833 = vld [vmem:[%s824 + $0x40] sm:$0xff]
      %v834 = vld [vmem:[%s824 + $0x48] sm:$0xff]
      %v835 = vld [vmem:[%s824 + $0x50] sm:$0xff]
      %v836 = vld [vmem:[%s824 + $0x58] sm:$0xff]
      %v837 = vld [vmem:[%s824 + $0x60] sm:$0xff]
      %v838 = vld [vmem:[%s824 + $0x68] sm:$0xff]
      %v839 = vld [vmem:[%s824 + $0x70] sm:$0xff]
      %v840 = vld [vmem:[%s824 + $0x78] sm:$0xff]
      %v842 = vunpack.c.l.b16 %v823
      %v843 = vpack.c.b16 %v569, %v842
      %v844 = vrot.slane %v843, 1
      %v862 = vunpack.c.l.b16 %v825
      %v863 = vunpack.c.h.b16 %v825
      %v864 = vunpack.c.l.b16 %v826
      %v865 = vunpack.c.h.b16 %v826
      %v866 = vunpack.c.l.b16 %v827
      %v867 = vunpack.c.h.b16 %v827
      %v868 = vunpack.c.l.b16 %v828
      %v869 = vunpack.c.h.b16 %v828
      %v870 = vunpack.c.l.b16 %v829
      %v871 = vunpack.c.h.b16 %v829
      %v872 = vunpack.c.l.b16 %v830
      %v873 = vunpack.c.h.b16 %v830
      %v874 = vunpack.c.l.b16 %v831
      %v875 = vunpack.c.h.b16 %v831
      %v876 = vunpack.c.l.b16 %v832
      %v877 = vunpack.c.h.b16 %v832
      %v878 = vunpack.c.l.b16 %v833
      %v879 = vunpack.c.h.b16 %v833
      %v880 = vunpack.c.l.b16 %v834
      %v881 = vunpack.c.h.b16 %v834
      %v882 = vunpack.c.l.b16 %v835
      %v883 = vunpack.c.h.b16 %v835
      %v884 = vunpack.c.l.b16 %v836
      %v885 = vunpack.c.h.b16 %v836
      %v886 = vunpack.c.l.b16 %v837
      %v887 = vunpack.c.h.b16 %v837
      %v888 = vunpack.c.l.b16 %v838
      %v889 = vunpack.c.h.b16 %v838
      %v890 = vunpack.c.l.b16 %v839
      %v891 = vunpack.c.h.b16 %v839
      %v892 = vunpack.c.l.b16 %v840
      %v893 = vunpack.c.h.b16 %v840
      %v894 = vpack.c.b16 %v864, %v862
      %v895 = vpack.c.b16 %v865, %v863
      %v896 = vpack.c.b16 %v868, %v866
      %v897 = vpack.c.b16 %v869, %v867
      %v898 = vpack.c.b16 %v872, %v870
      %v899 = vpack.c.b16 %v873, %v871
      %v900 = vpack.c.b16 %v876, %v874
      %v901 = vpack.c.b16 %v877, %v875
      %v902 = vpack.c.b16 %v880, %v878
      %v903 = vpack.c.b16 %v881, %v879
      %v904 = vpack.c.b16 %v884, %v882
      %v905 = vpack.c.b16 %v885, %v883
      %v906 = vpack.c.b16 %v888, %v886
      %v907 = vpack.c.b16 %v889, %v887
      %v908 = vpack.c.b16 %v892, %v890
      %v909 = vpack.c.b16 %v893, %v891
      %926 = vmatprep.subr.bf16.mxu0 %v895
      %927 = vmatpush1.bf16.msra.mxu0 %v894
      %928 = vmatprep.subr.bf16.mxu0 %v897
      %929 = vmatpush1.bf16.msra.mxu0 %v896
      %930 = vmatprep.subr.bf16.mxu0 %v899
      %931 = vmatpush1.bf16.msra.mxu0 %v898
      %932 = vmatprep.subr.bf16.mxu0 %v901
      %933 = vmatpush1.bf16.msra.mxu0 %v900
      %934 = vmatprep.subr.bf16.mxu0 %v903
      %935 = vmatpush1.bf16.msra.mxu0 %v902
      %936 = vmatprep.subr.bf16.mxu0 %v905
      %937 = vmatpush1.bf16.msra.mxu0 %v904
      %938 = vmatprep.subr.bf16.mxu0 %v907
      %939 = vmatpush1.bf16.msra.mxu0 %v906
      %940 = vmatprep.subr.bf16.mxu0 %v909
      %941 = vmatpush1.bf16.msra.mxu0 %v908
      %942 = vmatprep.subr.bf16.mxu0 0
      %943 = vmatpush1.bf16.msra.mxu0 0
      %944 = vmatprep.subr.bf16.mxu0 0
      %945 = vmatpush1.bf16.msra.mxu0 0
      %946 = vmatprep.subr.bf16.mxu0 0
      %947 = vmatpush1.bf16.msra.mxu0 0
      %948 = vmatprep.subr.bf16.mxu0 0
      %949 = vmatpush1.bf16.msra.mxu0 0
      %950 = vmatprep.subr.bf16.mxu0 0
      %951 = vmatpush1.bf16.msra.mxu0 0
      %952 = vmatprep.subr.bf16.mxu0 0
      %953 = vmatpush1.bf16.msra.mxu0 0
      %954 = vmatprep.subr.bf16.mxu0 0
      %955 = vmatpush1.bf16.msra.mxu0 0
      %956 = vmatprep.subr.bf16.mxu0 0
      %957 = vmatpush1.bf16.msra.mxu0 0
      %958 = vmatprep.mubr.bf16.mxu0 0
      %959 = vmatmul.mubr.bf16.gmra.mrb[0].mxu0 %v844
      %v960 = vpop.f32.mrb[0].mxu0
      %v961 = vadd.f32 0.0, %v960
      %v962 = vpop.f32.mrb[0].mxu0
      %v963 = vadd.f32 0.0, %v962
      %v964 = vpop.f32.mrb[0].mxu0
      %v965 = vpop.f32.mrb[0].mxu0
      %966 = vdwg.mxu0
      %v967 = vadd.f32 %v821, %v961
      %v968 = vadd.f32 %v822, %v963
      %v969 = vld [vmem:[%s288] sm:$0xe]
      %s970 = scalar_lea.vmem %s3, 144
      %v971 = vld [vmem:[%s970] sm:$0xff]
      %v972 = vld [vmem:[%s970 + $0x8] sm:$0xff]
      %v973 = vld [vmem:[%s970 + $0x10] sm:$0xff]
      %v974 = vld [vmem:[%s970 + $0x18] sm:$0xff]
      %v975 = vld [vmem:[%s970 + $0x20] sm:$0xff]
      %v976 = vld [vmem:[%s970 + $0x28] sm:$0xff]
      %v977 = vld [vmem:[%s970 + $0x30] sm:$0xff]
      %v978 = vld [vmem:[%s970 + $0x38] sm:$0xff]
      %v979 = vld [vmem:[%s970 + $0x40] sm:$0x11]
      %v981 = vunpack.c.l.b16 %v969
      %v982 = vpack.c.b16 %v717, %v981
      %v983 = vrot.slane %v982, 1
      %v993 = vunpack.c.l.b16 %v971
      %v994 = vunpack.c.h.b16 %v971
      %v995 = vunpack.c.l.b16 %v972
      %v996 = vunpack.c.h.b16 %v972
      %v997 = vunpack.c.l.b16 %v973
      %v998 = vunpack.c.h.b16 %v973
      %v999 = vunpack.c.l.b16 %v974
      %v1000 = vunpack.c.h.b16 %v974
      %v1001 = vunpack.c.l.b16 %v975
      %v1002 = vunpack.c.h.b16 %v975
      %v1003 = vunpack.c.l.b16 %v976
      %v1004 = vunpack.c.h.b16 %v976
      %v1005 = vunpack.c.l.b16 %v977
      %v1006 = vunpack.c.h.b16 %v977
      %v1007 = vunpack.c.l.b16 %v978
      %v1008 = vunpack.c.h.b16 %v978
      %v1009 = vunpack.c.l.b16 %v979
      %v1010 = vunpack.c.h.b16 %v979
      %v1011 = vpack.c.b16 %v995, %v993
      %v1012 = vpack.c.b16 %v996, %v994
      %v1013 = vpack.c.b16 %v999, %v997
      %v1014 = vpack.c.b16 %v1000, %v998
      %v1015 = vpack.c.b16 %v1003, %v1001
      %v1016 = vpack.c.b16 %v1004, %v1002
      %v1017 = vpack.c.b16 %v1007, %v1005
      %v1018 = vpack.c.b16 %v1008, %v1006
      %v1019 = vpack.c.b16 %v1009, %v1009
      %v1020 = vpack.c.b16 %v1010, %v1010
      %v1030 = vsel %vm372, %v983, 0
      %v1033 = vand.u32 %v1019, %v378
      %v1036 = vand.u32 %v1020, %v378
      %1038 = vmatprep.subr.bf16.mxu0 %v1012
      %1039 = vmatpush1.bf16.msra.mxu0 %v1011
      %1040 = vmatprep.subr.bf16.mxu0 %v1014
      %1041 = vmatpush1.bf16.msra.mxu0 %v1013
      %1042 = vmatprep.subr.bf16.mxu0 %v1016
      %1043 = vmatpush1.bf16.msra.mxu0 %v1015
      %1044 = vmatprep.subr.bf16.mxu0 %v1018
      %1045 = vmatpush1.bf16.msra.mxu0 %v1017
      %1046 = vmatprep.subr.bf16.mxu0 %v1036
      %1047 = vmatpush1.bf16.msra.mxu0 %v1033
      %1048 = vmatprep.subr.bf16.mxu0 0
      %1049 = vmatpush1.bf16.msra.mxu0 0
      %1050 = vmatprep.subr.bf16.mxu0 0
      %1051 = vmatpush1.bf16.msra.mxu0 0
      %1052 = vmatprep.subr.bf16.mxu0 0
      %1053 = vmatpush1.bf16.msra.mxu0 0
      %1054 = vmatprep.subr.bf16.mxu0 0
      %1055 = vmatpush1.bf16.msra.mxu0 0
      %1056 = vmatprep.subr.bf16.mxu0 0
      %1057 = vmatpush1.bf16.msra.mxu0 0
      %1058 = vmatprep.subr.bf16.mxu0 0
      %1059 = vmatpush1.bf16.msra.mxu0 0
      %1060 = vmatprep.subr.bf16.mxu0 0
      %1061 = vmatpush1.bf16.msra.mxu0 0
      %1062 = vmatprep.subr.bf16.mxu0 0
      %1063 = vmatpush1.bf16.msra.mxu0 0
      %1064 = vmatprep.subr.bf16.mxu0 0
      %1065 = vmatpush1.bf16.msra.mxu0 0
      %1066 = vmatprep.subr.bf16.mxu0 0
      %1067 = vmatpush1.bf16.msra.mxu0 0
      %1068 = vmatprep.subr.bf16.mxu0 0
      %1069 = vmatpush1.bf16.msra.mxu0 0
      %1070 = vmatprep.mubr.bf16.mxu0 0
      %1071 = vmatmul.mubr.bf16.gmra.mrb[0].mxu0 %v1030
      %v1072 = vpop.f32.mrb[0].mxu0
      %v1073 = vadd.f32 0.0, %v1072
      %v1074 = vpop.f32.mrb[0].mxu0
      %v1075 = vadd.f32 0.0, %v1074
      %v1076 = vpop.f32.mrb[0].mxu0
      %v1077 = vpop.f32.mrb[0].mxu0
      %1078 = vdwg.mxu0
      %v1079 = vadd.f32 %v967, %v1073
      %v1080 = vadd.f32 %v968, %v1075
      %v1081 = vld [vmem:[%s4] sm:$0x3]
      %v1083 = vlaneseq
      %v1084 = vshrl.u32 %v1083, 7
      %v1085 = vsub.s32 0, %v1084
      %v1086 = vrot.slane %v1081, %v1085
      %v1087 = vlaneseq
      %v1088 = vshrl.u32 %v1087, 7
      %v1089 = vsub.s32 1, %v1088
      %v1090 = vrot.slane %v1081, %v1089
      %v1093 = vadd.f32 %v1079, %v1086
      %v1094 = vadd.f32 %v1080, %v1090
      %v1095 = vmul.f32 %v1093, 0.2
      %v1096 = vmul.f32 %v1094, 0.2
      %v1097 = vmax.f32 %v1093, %v1095
      %v1098 = vmax.f32 %v1094, %v1096
      %vm1099 = vcmask 1040384
      %vm1100 = vsmask.f32 256
      %vm1101 = vmand %vm1099, %vm1100
      %vm1102 = vcmask 1044484
      %vm1103 = vsmask.f32 4352
      %vm1104 = vmand %vm1102, %vm1103
      %vm1105 = vmor %vm1104, %vm1101
      %v1106 = vld [vmem:[#allocation2] sm:$0x11]
      %v1107 = vsel %vm1105, 0, %v1106
      %1108 = vst [vmem:[#allocation2] sm:$0x11] %v1107
      %vm1109 = vsmask.f32 7938
      %vm1110 = vmand %vm1099, %vm1109
      %vm1111 = vsmask.f32 7954
      %vm1112 = vmand %vm1102, %vm1111
      %vm1113 = vmor %vm1112, %vm1110
      %v1114 = vld [vmem:[#allocation2 + $0x8] sm:$0x11]
      %v1115 = vsel %vm1113, 0, %v1114
      %1116 = vst [vmem:[#allocation2 + $0x8] sm:$0x11] %v1115
      %v1117 = vpack.c.bf16 %v1097, %v1097
      %v1118 = vpack.c.bf16 %v1098, %v1098
      %v1121 = vunpack.c.l.b16 %v1117
      %v1122 = vunpack.c.l.b16 %v1118
      %v1123 = vpack.c.b16 %v1122, %v1121
      %v1125 = vshrl.u32 %v1123, 16
      %v1127 = vrot.slane %v1125, 7
      %v1128 = vshll.u32 %v1123, 16
      %v1130 = vor.u32 %v1127, %v1128
      %v1131 = vrot.slane %v1127, 4
      %vm1134 = vcmask 1043456
      %vm1135 = vmand %vm1134, %vm1109
      %vm1136 = vcmask 1047556
      %vm1137 = vmand %vm1136, %vm1111
      %vm1138 = vmor %vm1137, %vm1135
      %v1139 = vld [vmem:[#allocation2] sm:$0xff]
      %v1140 = vsel %vm1138, %v1130, %v1139
      %1141 = vst [vmem:[#allocation2] sm:$0xff] %v1140
      %v1142 = vld [vmem:[#allocation2 + $0x8] sm:$0x11]
      %v1143 = vsel %vm1105, %v1131, %v1142
      %1144 = vst [vmem:[#allocation2 + $0x8] sm:$0x11] %v1143
      %v1145 = vld [vmem:[#allocation2] sm:$0xff]
      %v1146 = vld [vmem:[%s5] sm:$0xff]
      %v1147 = vld [vmem:[%s5 + $0x8] sm:$0xff]
      %v1148 = vld [vmem:[%s5 + $0x10] sm:$0xff]
      %v1149 = vld [vmem:[%s5 + $0x18] sm:$0xff]
      %v1150 = vld [vmem:[%s5 + $0x20] sm:$0xff]
      %v1151 = vld [vmem:[%s5 + $0x28] sm:$0xff]
      %v1152 = vld [vmem:[%s5 + $0x30] sm:$0xff]
      %v1153 = vld [vmem:[%s5 + $0x38] sm:$0xff]
      %v1154 = vld [vmem:[%s5 + $0x40] sm:$0xff]
      %v1155 = vld [vmem:[%s5 + $0x48] sm:$0xff]
      %v1156 = vld [vmem:[%s5 + $0x50] sm:$0xff]
      %v1157 = vld [vmem:[%s5 + $0x58] sm:$0xff]
      %v1158 = vld [vmem:[%s5 + $0x60] sm:$0xff]
      %v1159 = vld [vmem:[%s5 + $0x68] sm:$0xff]
      %v1160 = vld [vmem:[%s5 + $0x70] sm:$0xff]
      %v1161 = vld [vmem:[%s5 + $0x78] sm:$0xff]
      %v1162 = vld [vmem:[%s5 + $0x80] sm:$0xff]
      %v1163 = vld [vmem:[%s5 + $0x88] sm:$0xff]
      %v1164 = vld [vmem:[%s5 + $0x90] sm:$0xff]
      %v1165 = vld [vmem:[%s5 + $0x98] sm:$0xff]
      %v1166 = vld [vmem:[%s5 + $0xa0] sm:$0xff]
      %v1167 = vld [vmem:[%s5 + $0xa8] sm:$0xff]
      %v1168 = vld [vmem:[%s5 + $0xb0] sm:$0xff]
      %v1169 = vld [vmem:[%s5 + $0xb8] sm:$0xff]
      %v1170 = vld [vmem:[%s5 + $0xc0] sm:$0xff]
      %v1171 = vld [vmem:[%s5 + $0xc8] sm:$0xff]
      %v1172 = vld [vmem:[%s5 + $0xd0] sm:$0xff]
      %v1173 = vld [vmem:[%s5 + $0xd8] sm:$0xff]
      %v1174 = vld [vmem:[%s5 + $0xe0] sm:$0xff]
      %v1175 = vld [vmem:[%s5 + $0xe8] sm:$0xff]
      %v1176 = vld [vmem:[%s5 + $0xf0] sm:$0xff]
      %v1177 = vld [vmem:[%s5 + $0xf8] sm:$0xff]
      %v1178 = vld [vmem:[#allocation2 + $0x8] sm:$0x11]
      %s1179 = scalar_lea.vmem %s5, 256
      %v1180 = vld [vmem:[%s1179] sm:$0xff]
      %v1181 = vld [vmem:[%s1179 + $0x8] sm:$0xff]
      %v1182 = vld [vmem:[%s1179 + $0x10] sm:$0xff]
      %v1183 = vld [vmem:[%s1179 + $0x18] sm:$0xff]
      %v1184 = vld [vmem:[%s1179 + $0x20] sm:$0xff]
      %v1185 = vld [vmem:[%s1179 + $0x28] sm:$0xff]
      %v1186 = vld [vmem:[%s1179 + $0x30] sm:$0xff]
      %v1187 = vld [vmem:[%s1179 + $0x38] sm:$0xff]
      %v1188 = vld [vmem:[%s1179 + $0x40] sm:$0xff]
      %v1189 = vld [vmem:[%s1179 + $0x48] sm:$0xff]
      %v1190 = vld [vmem:[%s1179 + $0x50] sm:$0xff]
      %v1191 = vld [vmem:[%s1179 + $0x58] sm:$0xff]
      %v1192 = vld [vmem:[%s1179 + $0x60] sm:$0xff]
      %v1193 = vld [vmem:[%s1179 + $0x68] sm:$0xff]
      %v1194 = vld [vmem:[%s1179 + $0x70] sm:$0xff]
      %v1195 = vld [vmem:[%s1179 + $0x78] sm:$0xff]
      %v1196 = vld [vmem:[%s1179 + $0x80] sm:$0xff]
      %v1197 = vld [vmem:[%s1179 + $0x88] sm:$0xff]
      %v1198 = vld [vmem:[%s1179 + $0x90] sm:$0xff]
      %v1199 = vld [vmem:[%s1179 + $0x98] sm:$0xff]
      %v1200 = vld [vmem:[%s1179 + $0xa0] sm:$0xff]
      %v1201 = vld [vmem:[%s1179 + $0xa8] sm:$0xff]
      %v1202 = vld [vmem:[%s1179 + $0xb0] sm:$0xff]
      %v1203 = vld [vmem:[%s1179 + $0xb8] sm:$0xff]
      %v1204 = vld [vmem:[%s1179 + $0xc0] sm:$0xff]
      %v1205 = vld [vmem:[%s1179 + $0xc8] sm:$0xff]
      %v1206 = vld [vmem:[%s1179 + $0xd0] sm:$0xff]
      %v1207 = vld [vmem:[%s1179 + $0xd8] sm:$0xff]
      %v1208 = vld [vmem:[%s1179 + $0xe0] sm:$0xff]
      %v1209 = vld [vmem:[%s1179 + $0xe8] sm:$0xff]
      %v1210 = vld [vmem:[%s1179 + $0xf0] sm:$0xff]
      %v1211 = vld [vmem:[%s1179 + $0xf8] sm:$0xff]
      %v1214 = vunpack.c.l.b16 %v1145
      %v1215 = vunpack.c.h.b16 %v1145
      %v1216 = vunpack.c.l.b16 %v1178
      %v1217 = vunpack.c.h.b16 %v1178
      %v1218 = vpack.c.b16 %v1216, %v1214
      %v1219 = vpack.c.b16 %v1217, %v1215
      %v1221 = vshrl.u32 %v1218, 16
      %v1223 = vshll.u32 %v1218, 16
      %v1225 = vrot.slane %v1223, 1
      %v1226 = vor.u32 %v1221, %v1225
      %v1228 = vshrl.u32 %v1219, 16
      %v1230 = vshll.u32 %v1219, 16
      %v1232 = vrot.slane %v1230, 1
      %v1233 = vor.u32 %v1228, %v1232
      %v1268 = vunpack.c.l.b16 %v1180
      %v1269 = vunpack.c.h.b16 %v1180
      %v1270 = vunpack.c.l.b16 %v1181
      %v1271 = vunpack.c.h.b16 %v1181
      %v1272 = vunpack.c.l.b16 %v1182
      %v1273 = vunpack.c.h.b16 %v1182
      %v1274 = vunpack.c.l.b16 %v1183
      %v1275 = vunpack.c.h.b16 %v1183
      %v1276 = vunpack.c.l.b16 %v1184
      %v1277 = vunpack.c.h.b16 %v1184
      %v1278 = vunpack.c.l.b16 %v1185
      %v1279 = vunpack.c.h.b16 %v1185
      %v1280 = vunpack.c.l.b16 %v1186
      %v1281 = vunpack.c.h.b16 %v1186
      %v1282 = vunpack.c.l.b16 %v1187
      %v1283 = vunpack.c.h.b16 %v1187
      %v1284 = vunpack.c.l.b16 %v1188
      %v1285 = vunpack.c.h.b16 %v1188
      %v1286 = vunpack.c.l.b16 %v1189
      %v1287 = vunpack.c.h.b16 %v1189
      %v1288 = vunpack.c.l.b16 %v1190
      %v1289 = vunpack.c.h.b16 %v1190
      %v1290 = vunpack.c.l.b16 %v1191
      %v1291 = vunpack.c.h.b16 %v1191
      %v1292 = vunpack.c.l.b16 %v1192
      %v1293 = vunpack.c.h.b16 %v1192
      %v1294 = vunpack.c.l.b16 %v1193
      %v1295 = vunpack.c.h.b16 %v1193
      %v1296 = vunpack.c.l.b16 %v1194
      %v1297 = vunpack.c.h.b16 %v1194
      %v1298 = vunpack.c.l.b16 %v1195
      %v1299 = vunpack.c.h.b16 %v1195
      %v1300 = vunpack.c.l.b16 %v1196
      %v1301 = vunpack.c.h.b16 %v1196
      %v1302 = vunpack.c.l.b16 %v1197
      %v1303 = vunpack.c.h.b16 %v1197
      %v1304 = vunpack.c.l.b16 %v1198
      %v1305 = vunpack.c.h.b16 %v1198
      %v1306 = vunpack.c.l.b16 %v1199
      %v1307 = vunpack.c.h.b16 %v1199
      %v1308 = vunpack.c.l.b16 %v1200
      %v1309 = vunpack.c.h.b16 %v1200
      %v1310 = vunpack.c.l.b16 %v1201
      %v1311 = vunpack.c.h.b16 %v1201
      %v1312 = vunpack.c.l.b16 %v1202
      %v1313 = vunpack.c.h.b16 %v1202
      %v1314 = vunpack.c.l.b16 %v1203
      %v1315 = vunpack.c.h.b16 %v1203
      %v1316 = vunpack.c.l.b16 %v1204
      %v1317 = vunpack.c.h.b16 %v1204
      %v1318 = vunpack.c.l.b16 %v1205
      %v1319 = vunpack.c.h.b16 %v1205
      %v1320 = vunpack.c.l.b16 %v1206
      %v1321 = vunpack.c.h.b16 %v1206
      %v1322 = vunpack.c.l.b16 %v1207
      %v1323 = vunpack.c.h.b16 %v1207
      %v1324 = vunpack.c.l.b16 %v1208
      %v1325 = vunpack.c.h.b16 %v1208
      %v1326 = vunpack.c.l.b16 %v1209
      %v1327 = vunpack.c.h.b16 %v1209
      %v1328 = vunpack.c.l.b16 %v1210
      %v1329 = vunpack.c.h.b16 %v1210
      %v1330 = vunpack.c.l.b16 %v1211
      %v1331 = vunpack.c.h.b16 %v1211
      %v1332 = vpack.c.b16 %v1270, %v1268
      %v1333 = vpack.c.b16 %v1271, %v1269
      %v1334 = vpack.c.b16 %v1274, %v1272
      %v1335 = vpack.c.b16 %v1275, %v1273
      %v1336 = vpack.c.b16 %v1278, %v1276
      %v1337 = vpack.c.b16 %v1279, %v1277
      %v1338 = vpack.c.b16 %v1282, %v1280
      %v1339 = vpack.c.b16 %v1283, %v1281
      %v1340 = vpack.c.b16 %v1286, %v1284
      %v1341 = vpack.c.b16 %v1287, %v1285
      %v1342 = vpack.c.b16 %v1290, %v1288
      %v1343 = vpack.c.b16 %v1291, %v1289
      %v1344 = vpack.c.b16 %v1294, %v1292
      %v1345 = vpack.c.b16 %v1295, %v1293
      %v1346 = vpack.c.b16 %v1298, %v1296
      %v1347 = vpack.c.b16 %v1299, %v1297
      %v1348 = vpack.c.b16 %v1302, %v1300
      %v1349 = vpack.c.b16 %v1303, %v1301
      %v1350 = vpack.c.b16 %v1306, %v1304
      %v1351 = vpack.c.b16 %v1307, %v1305
      %v1352 = vpack.c.b16 %v1310, %v1308
      %v1353 = vpack.c.b16 %v1311, %v1309
      %v1354 = vpack.c.b16 %v1314, %v1312
      %v1355 = vpack.c.b16 %v1315, %v1313
      %v1356 = vpack.c.b16 %v1318, %v1316
      %v1357 = vpack.c.b16 %v1319, %v1317
      %v1358 = vpack.c.b16 %v1322, %v1320
      %v1359 = vpack.c.b16 %v1323, %v1321
      %v1360 = vpack.c.b16 %v1326, %v1324
      %v1361 = vpack.c.b16 %v1327, %v1325
      %v1362 = vpack.c.b16 %v1330, %v1328
      %v1363 = vpack.c.b16 %v1331, %v1329
      %1396 = vmatprep.subr.bf16.mxu0 %v1333
      %1397 = vmatpush1.bf16.msra.mxu0 %v1332
      %1398 = vmatprep.subr.bf16.mxu0 %v1335
      %1399 = vmatpush1.bf16.msra.mxu0 %v1334
      %1400 = vmatprep.subr.bf16.mxu0 %v1337
      %1401 = vmatpush1.bf16.msra.mxu0 %v1336
      %1402 = vmatprep.subr.bf16.mxu0 %v1339
      %1403 = vmatpush1.bf16.msra.mxu0 %v1338
      %1404 = vmatprep.subr.bf16.mxu0 %v1341
      %1405 = vmatpush1.bf16.msra.mxu0 %v1340
      %1406 = vmatprep.subr.bf16.mxu0 %v1343
      %1407 = vmatpush1.bf16.msra.mxu0 %v1342
      %1408 = vmatprep.subr.bf16.mxu0 %v1345
      %1409 = vmatpush1.bf16.msra.mxu0 %v1344
      %1410 = vmatprep.subr.bf16.mxu0 %v1347
      %1411 = vmatpush1.bf16.msra.mxu0 %v1346
      %1412 = vmatprep.subr.bf16.mxu0 %v1349
      %1413 = vmatpush1.bf16.msra.mxu0 %v1348
      %1414 = vmatprep.subr.bf16.mxu0 %v1351
      %1415 = vmatpush1.bf16.msra.mxu0 %v1350
      %1416 = vmatprep.subr.bf16.mxu0 %v1353
      %1417 = vmatpush1.bf16.msra.mxu0 %v1352
      %1418 = vmatprep.subr.bf16.mxu0 %v1355
      %1419 = vmatpush1.bf16.msra.mxu0 %v1354
      %1420 = vmatprep.subr.bf16.mxu0 %v1357
      %1421 = vmatpush1.bf16.msra.mxu0 %v1356
      %1422 = vmatprep.subr.bf16.mxu0 %v1359
      %1423 = vmatpush1.bf16.msra.mxu0 %v1358
      %1424 = vmatprep.subr.bf16.mxu0 %v1361
      %1425 = vmatpush1.bf16.msra.mxu0 %v1360
      %1426 = vmatprep.subr.bf16.mxu0 %v1363
      %1427 = vmatpush1.bf16.msra.mxu0 %v1362
      %1428 = vmatprep.mubr.bf16.mxu0 %v1233
      %1429 = vmatmul.mubr.bf16.gmra.mrb[0].mxu0 %v1226
      %v1430 = vpop.f32.mrb[0].mxu0
      %v1431 = vadd.f32 0.0, %v1430
      %v1432 = vpop.f32.mrb[0].mxu0
      %v1433 = vadd.f32 0.0, %v1432
      %v1434 = vpop.f32.mrb[0].mxu0
      %v1435 = vpop.f32.mrb[0].mxu0
      %1436 = vdwg.mxu0
      %v1437 = vpack.c.b16 %v1214, %v1214
      %v1438 = vpack.c.b16 %v1215, %v1215
      %v1473 = vunpack.c.l.b16 %v1146
      %v1474 = vunpack.c.h.b16 %v1146
      %v1475 = vunpack.c.l.b16 %v1147
      %v1476 = vunpack.c.h.b16 %v1147
      %v1477 = vunpack.c.l.b16 %v1148
      %v1478 = vunpack.c.h.b16 %v1148
      %v1479 = vunpack.c.l.b16 %v1149
      %v1480 = vunpack.c.h.b16 %v1149
      %v1481 = vunpack.c.l.b16 %v1150
      %v1482 = vunpack.c.h.b16 %v1150
      %v1483 = vunpack.c.l.b16 %v1151
      %v1484 = vunpack.c.h.b16 %v1151
      %v1485 = vunpack.c.l.b16 %v1152
      %v1486 = vunpack.c.h.b16 %v1152
      %v1487 = vunpack.c.l.b16 %v1153
      %v1488 = vunpack.c.h.b16 %v1153
      %v1489 = vunpack.c.l.b16 %v1154
      %v1490 = vunpack.c.h.b16 %v1154
      %v1491 = vunpack.c.l.b16 %v1155
      %v1492 = vunpack.c.h.b16 %v1155
      %v1493 = vunpack.c.l.b16 %v1156
      %v1494 = vunpack.c.h.b16 %v1156
      %v1495 = vunpack.c.l.b16 %v1157
      %v1496 = vunpack.c.h.b16 %v1157
      %v1497 = vunpack.c.l.b16 %v1158
      %v1498 = vunpack.c.h.b16 %v1158
      %v1499 = vunpack.c.l.b16 %v1159
      %v1500 = vunpack.c.h.b16 %v1159
      %v1501 = vunpack.c.l.b16 %v1160
      %v1502 = vunpack.c.h.b16 %v1160
      %v1503 = vunpack.c.l.b16 %v1161
      %v1504 = vunpack.c.h.b16 %v1161
      %v1505 = vunpack.c.l.b16 %v1162
      %v1506 = vunpack.c.h.b16 %v1162
      %v1507 = vunpack.c.l.b16 %v1163
      %v1508 = vunpack.c.h.b16 %v1163
      %v1509 = vunpack.c.l.b16 %v1164
      %v1510 = vunpack.c.h.b16 %v1164
      %v1511 = vunpack.c.l.b16 %v1165
      %v1512 = vunpack.c.h.b16 %v1165
      %v1513 = vunpack.c.l.b16 %v1166
      %v1514 = vunpack.c.h.b16 %v1166
      %v1515 = vunpack.c.l.b16 %v1167
      %v1516 = vunpack.c.h.b16 %v1167
      %v1517 = vunpack.c.l.b16 %v1168
      %v1518 = vunpack.c.h.b16 %v1168
      %v1519 = vunpack.c.l.b16 %v1169
      %v1520 = vunpack.c.h.b16 %v1169
      %v1521 = vunpack.c.l.b16 %v1170
      %v1522 = vunpack.c.h.b16 %v1170
      %v1523 = vunpack.c.l.b16 %v1171
      %v1524 = vunpack.c.h.b16 %v1171
      %v1525 = vunpack.c.l.b16 %v1172
      %v1526 = vunpack.c.h.b16 %v1172
      %v1527 = vunpack.c.l.b16 %v1173
      %v1528 = vunpack.c.h.b16 %v1173
      %v1529 = vunpack.c.l.b16 %v1174
      %v1530 = vunpack.c.h.b16 %v1174
      %v1531 = vunpack.c.l.b16 %v1175
      %v1532 = vunpack.c.h.b16 %v1175
      %v1533 = vunpack.c.l.b16 %v1176
      %v1534 = vunpack.c.h.b16 %v1176
      %v1535 = vunpack.c.l.b16 %v1177
      %v1536 = vunpack.c.h.b16 %v1177
      %v1537 = vpack.c.b16 %v1475, %v1473
      %v1538 = vpack.c.b16 %v1476, %v1474
      %v1539 = vpack.c.b16 %v1479, %v1477
      %v1540 = vpack.c.b16 %v1480, %v1478
      %v1541 = vpack.c.b16 %v1483, %v1481
      %v1542 = vpack.c.b16 %v1484, %v1482
      %v1543 = vpack.c.b16 %v1487, %v1485
      %v1544 = vpack.c.b16 %v1488, %v1486
      %v1545 = vpack.c.b16 %v1491, %v1489
      %v1546 = vpack.c.b16 %v1492, %v1490
      %v1547 = vpack.c.b16 %v1495, %v1493
      %v1548 = vpack.c.b16 %v1496, %v1494
      %v1549 = vpack.c.b16 %v1499, %v1497
      %v1550 = vpack.c.b16 %v1500, %v1498
      %v1551 = vpack.c.b16 %v1503, %v1501
      %v1552 = vpack.c.b16 %v1504, %v1502
      %v1553 = vpack.c.b16 %v1507, %v1505
      %v1554 = vpack.c.b16 %v1508, %v1506
      %v1555 = vpack.c.b16 %v1511, %v1509
      %v1556 = vpack.c.b16 %v1512, %v1510
      %v1557 = vpack.c.b16 %v1515, %v1513
      %v1558 = vpack.c.b16 %v1516, %v1514
      %v1559 = vpack.c.b16 %v1519, %v1517
      %v1560 = vpack.c.b16 %v1520, %v1518
      %v1561 = vpack.c.b16 %v1523, %v1521
      %v1562 = vpack.c.b16 %v1524, %v1522
      %v1563 = vpack.c.b16 %v1527, %v1525
      %v1564 = vpack.c.b16 %v1528, %v1526
      %v1565 = vpack.c.b16 %v1531, %v1529
      %v1566 = vpack.c.b16 %v1532, %v1530
      %v1567 = vpack.c.b16 %v1535, %v1533
      %v1568 = vpack.c.b16 %v1536, %v1534
      %1601 = vmatprep.subr.bf16.mxu0 %v1538
      %1602 = vmatpush1.bf16.msra.mxu0 %v1537
      %1603 = vmatprep.subr.bf16.mxu0 %v1540
      %1604 = vmatpush1.bf16.msra.mxu0 %v1539
      %1605 = vmatprep.subr.bf16.mxu0 %v1542
      %1606 = vmatpush1.bf16.msra.mxu0 %v1541
      %1607 = vmatprep.subr.bf16.mxu0 %v1544
      %1608 = vmatpush1.bf16.msra.mxu0 %v1543
      %1609 = vmatprep.subr.bf16.mxu0 %v1546
      %1610 = vmatpush1.bf16.msra.mxu0 %v1545
      %1611 = vmatprep.subr.bf16.mxu0 %v1548
      %1612 = vmatpush1.bf16.msra.mxu0 %v1547
      %1613 = vmatprep.subr.bf16.mxu0 %v1550
      %1614 = vmatpush1.bf16.msra.mxu0 %v1549
      %1615 = vmatprep.subr.bf16.mxu0 %v1552
      %1616 = vmatpush1.bf16.msra.mxu0 %v1551
      %1617 = vmatprep.subr.bf16.mxu0 %v1554
      %1618 = vmatpush1.bf16.msra.mxu0 %v1553
      %1619 = vmatprep.subr.bf16.mxu0 %v1556
      %1620 = vmatpush1.bf16.msra.mxu0 %v1555
      %1621 = vmatprep.subr.bf16.mxu0 %v1558
      %1622 = vmatpush1.bf16.msra.mxu0 %v1557
      %1623 = vmatprep.subr.bf16.mxu0 %v1560
      %1624 = vmatpush1.bf16.msra.mxu0 %v1559
      %1625 = vmatprep.subr.bf16.mxu0 %v1562
      %1626 = vmatpush1.bf16.msra.mxu0 %v1561
      %1627 = vmatprep.subr.bf16.mxu0 %v1564
      %1628 = vmatpush1.bf16.msra.mxu0 %v1563
      %1629 = vmatprep.subr.bf16.mxu0 %v1566
      %1630 = vmatpush1.bf16.msra.mxu0 %v1565
      %1631 = vmatprep.subr.bf16.mxu0 %v1568
      %1632 = vmatpush1.bf16.msra.mxu0 %v1567
      %1633 = vmatprep.mubr.bf16.mxu0 %v1438
      %1634 = vmatmul.mubr.bf16.gmra.mrb[0].mxu0 %v1437
      %v1635 = vpop.f32.mrb[0].mxu0
      %v1636 = vadd.f32 %v1431, %v1635
      %v1637 = vpop.f32.mrb[0].mxu0
      %v1638 = vadd.f32 %v1433, %v1637
      %v1639 = vpop.f32.mrb[0].mxu0
      %v1640 = vpop.f32.mrb[0].mxu0
      %1641 = vdwg.mxu0
      %v1642 = vld [vmem:[#allocation2] sm:$0xee]
      %s1643 = scalar_lea.vmem %s5, 512
      %v1644 = vld [vmem:[%s1643] sm:$0xff]
      %v1645 = vld [vmem:[%s1643 + $0x8] sm:$0xff]
      %v1646 = vld [vmem:[%s1643 + $0x10] sm:$0xff]
      %v1647 = vld [vmem:[%s1643 + $0x18] sm:$0xff]
      %v1648 = vld [vmem:[%s1643 + $0x20] sm:$0xff]
      %v1649 = vld [vmem:[%s1643 + $0x28] sm:$0xff]
      %v1650 = vld [vmem:[%s1643 + $0x30] sm:$0xff]
      %v1651 = vld [vmem:[%s1643 + $0x38] sm:$0xff]
      %v1652 = vld [vmem:[%s1643 + $0x40] sm:$0xff]
      %v1653 = vld [vmem:[%s1643 + $0x48] sm:$0xff]
      %v1654 = vld [vmem:[%s1643 + $0x50] sm:$0xff]
      %v1655 = vld [vmem:[%s1643 + $0x58] sm:$0xff]
      %v1656 = vld [vmem:[%s1643 + $0x60] sm:$0xff]
      %v1657 = vld [vmem:[%s1643 + $0x68] sm:$0xff]
      %v1658 = vld [vmem:[%s1643 + $0x70] sm:$0xff]
      %v1659 = vld [vmem:[%s1643 + $0x78] sm:$0xff]
      %v1660 = vld [vmem:[%s1643 + $0x80] sm:$0xff]
      %v1661 = vld [vmem:[%s1643 + $0x88] sm:$0xff]
      %v1662 = vld [vmem:[%s1643 + $0x90] sm:$0xff]
      %v1663 = vld [vmem:[%s1643 + $0x98] sm:$0xff]
      %v1664 = vld [vmem:[%s1643 + $0xa0] sm:$0xff]
      %v1665 = vld [vmem:[%s1643 + $0xa8] sm:$0xff]
      %v1666 = vld [vmem:[%s1643 + $0xb0] sm:$0xff]
      %v1667 = vld [vmem:[%s1643 + $0xb8] sm:$0xff]
      %v1668 = vld [vmem:[%s1643 + $0xc0] sm:$0xff]
      %v1669 = vld [vmem:[%s1643 + $0xc8] sm:$0xff]
      %v1670 = vld [vmem:[%s1643 + $0xd0] sm:$0xff]
      %v1671 = vld [vmem:[%s1643 + $0xd8] sm:$0xff]
      %v1672 = vld [vmem:[%s1643 + $0xe0] sm:$0xff]
      %v1673 = vld [vmem:[%s1643 + $0xe8] sm:$0xff]
      %v1674 = vld [vmem:[%s1643 + $0xf0] sm:$0xff]
      %v1675 = vld [vmem:[%s1643 + $0xf8] sm:$0xff]
      %v1677 = vunpack.c.l.b16 %v1642
      %v1678 = vunpack.c.h.b16 %v1642
      %v1679 = vpack.c.b16 %v1216, %v1677
      %v1680 = vpack.c.b16 %v1217, %v1678
      %v1681 = vrot.slane %v1679, 1
      %v1682 = vrot.slane %v1680, 1
      %v1717 = vunpack.c.l.b16 %v1644
      %v1718 = vunpack.c.h.b16 %v1644
      %v1719 = vunpack.c.l.b16 %v1645
      %v1720 = vunpack.c.h.b16 %v1645
      %v1721 = vunpack.c.l.b16 %v1646
      %v1722 = vunpack.c.h.b16 %v1646
      %v1723 = vunpack.c.l.b16 %v1647
      %v1724 = vunpack.c.h.b16 %v1647
      %v1725 = vunpack.c.l.b16 %v1648
      %v1726 = vunpack.c.h.b16 %v1648
      %v1727 = vunpack.c.l.b16 %v1649
      %v1728 = vunpack.c.h.b16 %v1649
      %v1729 = vunpack.c.l.b16 %v1650
      %v1730 = vunpack.c.h.b16 %v1650
      %v1731 = vunpack.c.l.b16 %v1651
      %v1732 = vunpack.c.h.b16 %v1651
      %v1733 = vunpack.c.l.b16 %v1652
      %v1734 = vunpack.c.h.b16 %v1652
      %v1735 = vunpack.c.l.b16 %v1653
      %v1736 = vunpack.c.h.b16 %v1653
      %v1737 = vunpack.c.l.b16 %v1654
      %v1738 = vunpack.c.h.b16 %v1654
      %v1739 = vunpack.c.l.b16 %v1655
      %v1740 = vunpack.c.h.b16 %v1655
      %v1741 = vunpack.c.l.b16 %v1656
      %v1742 = vunpack.c.h.b16 %v1656
      %v1743 = vunpack.c.l.b16 %v1657
      %v1744 = vunpack.c.h.b16 %v1657
      %v1745 = vunpack.c.l.b16 %v1658
      %v1746 = vunpack.c.h.b16 %v1658
      %v1747 = vunpack.c.l.b16 %v1659
      %v1748 = vunpack.c.h.b16 %v1659
      %v1749 = vunpack.c.l.b16 %v1660
      %v1750 = vunpack.c.h.b16 %v1660
      %v1751 = vunpack.c.l.b16 %v1661
      %v1752 = vunpack.c.h.b16 %v1661
      %v1753 = vunpack.c.l.b16 %v1662
      %v1754 = vunpack.c.h.b16 %v1662
      %v1755 = vunpack.c.l.b16 %v1663
      %v1756 = vunpack.c.h.b16 %v1663
      %v1757 = vunpack.c.l.b16 %v1664
      %v1758 = vunpack.c.h.b16 %v1664
      %v1759 = vunpack.c.l.b16 %v1665
      %v1760 = vunpack.c.h.b16 %v1665
      %v1761 = vunpack.c.l.b16 %v1666
      %v1762 = vunpack.c.h.b16 %v1666
      %v1763 = vunpack.c.l.b16 %v1667
      %v1764 = vunpack.c.h.b16 %v1667
      %v1765 = vunpack.c.l.b16 %v1668
      %v1766 = vunpack.c.h.b16 %v1668
      %v1767 = vunpack.c.l.b16 %v1669
      %v1768 = vunpack.c.h.b16 %v1669
      %v1769 = vunpack.c.l.b16 %v1670
      %v1770 = vunpack.c.h.b16 %v1670
      %v1771 = vunpack.c.l.b16 %v1671
      %v1772 = vunpack.c.h.b16 %v1671
      %v1773 = vunpack.c.l.b16 %v1672
      %v1774 = vunpack.c.h.b16 %v1672
      %v1775 = vunpack.c.l.b16 %v1673
      %v1776 = vunpack.c.h.b16 %v1673
      %v1777 = vunpack.c.l.b16 %v1674
      %v1778 = vunpack.c.h.b16 %v1674
      %v1779 = vunpack.c.l.b16 %v1675
      %v1780 = vunpack.c.h.b16 %v1675
      %v1781 = vpack.c.b16 %v1719, %v1717
      %v1782 = vpack.c.b16 %v1720, %v1718
      %v1783 = vpack.c.b16 %v1723, %v1721
      %v1784 = vpack.c.b16 %v1724, %v1722
      %v1785 = vpack.c.b16 %v1727, %v1725
      %v1786 = vpack.c.b16 %v1728, %v1726
      %v1787 = vpack.c.b16 %v1731, %v1729
      %v1788 = vpack.c.b16 %v1732, %v1730
      %v1789 = vpack.c.b16 %v1735, %v1733
      %v1790 = vpack.c.b16 %v1736, %v1734
      %v1791 = vpack.c.b16 %v1739, %v1737
      %v1792 = vpack.c.b16 %v1740, %v1738
      %v1793 = vpack.c.b16 %v1743, %v1741
      %v1794 = vpack.c.b16 %v1744, %v1742
      %v1795 = vpack.c.b16 %v1747, %v1745
      %v1796 = vpack.c.b16 %v1748, %v1746
      %v1797 = vpack.c.b16 %v1751, %v1749
      %v1798 = vpack.c.b16 %v1752, %v1750
      %v1799 = vpack.c.b16 %v1755, %v1753
      %v1800 = vpack.c.b16 %v1756, %v1754
      %v1801 = vpack.c.b16 %v1759, %v1757
      %v1802 = vpack.c.b16 %v1760, %v1758
      %v1803 = vpack.c.b16 %v1763, %v1761
      %v1804 = vpack.c.b16 %v1764, %v1762
      %v1805 = vpack.c.b16 %v1767, %v1765
      %v1806 = vpack.c.b16 %v1768, %v1766
      %v1807 = vpack.c.b16 %v1771, %v1769
      %v1808 = vpack.c.b16 %v1772, %v1770
      %v1809 = vpack.c.b16 %v1775, %v1773
      %v1810 = vpack.c.b16 %v1776, %v1774
      %v1811 = vpack.c.b16 %v1779, %v1777
      %v1812 = vpack.c.b16 %v1780, %v1778
      %1845 = vmatprep.subr.bf16.mxu0 %v1782
      %1846 = vmatpush1.bf16.msra.mxu0 %v1781
      %1847 = vmatprep.subr.bf16.mxu0 %v1784
      %1848 = vmatpush1.bf16.msra.mxu0 %v1783
      %1849 = vmatprep.subr.bf16.mxu0 %v1786
      %1850 = vmatpush1.bf16.msra.mxu0 %v1785
      %1851 = vmatprep.subr.bf16.mxu0 %v1788
      %1852 = vmatpush1.bf16.msra.mxu0 %v1787
      %1853 = vmatprep.subr.bf16.mxu0 %v1790
      %1854 = vmatpush1.bf16.msra.mxu0 %v1789
      %1855 = vmatprep.subr.bf16.mxu0 %v1792
      %1856 = vmatpush1.bf16.msra.mxu0 %v1791
      %1857 = vmatprep.subr.bf16.mxu0 %v1794
      %1858 = vmatpush1.bf16.msra.mxu0 %v1793
      %1859 = vmatprep.subr.bf16.mxu0 %v1796
      %1860 = vmatpush1.bf16.msra.mxu0 %v1795
      %1861 = vmatprep.subr.bf16.mxu0 %v1798
      %1862 = vmatpush1.bf16.msra.mxu0 %v1797
      %1863 = vmatprep.subr.bf16.mxu0 %v1800
      %1864 = vmatpush1.bf16.msra.mxu0 %v1799
      %1865 = vmatprep.subr.bf16.mxu0 %v1802
      %1866 = vmatpush1.bf16.msra.mxu0 %v1801
      %1867 = vmatprep.subr.bf16.mxu0 %v1804
      %1868 = vmatpush1.bf16.msra.mxu0 %v1803
      %1869 = vmatprep.subr.bf16.mxu0 %v1806
      %1870 = vmatpush1.bf16.msra.mxu0 %v1805
      %1871 = vmatprep.subr.bf16.mxu0 %v1808
      %1872 = vmatpush1.bf16.msra.mxu0 %v1807
      %1873 = vmatprep.subr.bf16.mxu0 %v1810
      %1874 = vmatpush1.bf16.msra.mxu0 %v1809
      %1875 = vmatprep.subr.bf16.mxu0 %v1812
      %1876 = vmatpush1.bf16.msra.mxu0 %v1811
      %1877 = vmatprep.mubr.bf16.mxu0 %v1682
      %1878 = vmatmul.mubr.bf16.gmra.mrb[0].mxu0 %v1681
      %v1879 = vpop.f32.mrb[0].mxu0
      %v1880 = vadd.f32 0.0, %v1879
      %v1881 = vpop.f32.mrb[0].mxu0
      %v1882 = vadd.f32 0.0, %v1881
      %v1883 = vpop.f32.mrb[0].mxu0
      %v1884 = vpop.f32.mrb[0].mxu0
      %1885 = vdwg.mxu0
      %v1886 = vadd.f32 %v1636, %v1880
      %v1887 = vadd.f32 %v1638, %v1882
      %v1888 = vld [vmem:[%s6] sm:$0x3]
      %v1890 = vlaneseq
      %v1891 = vshrl.u32 %v1890, 7
      %v1892 = vsub.s32 0, %v1891
      %v1893 = vrot.slane %v1888, %v1892
      %v1894 = vlaneseq
      %v1895 = vshrl.u32 %v1894, 7
      %v1896 = vsub.s32 1, %v1895
      %v1897 = vrot.slane %v1888, %v1896
      %v1900 = vadd.f32 %v1886, %v1893
      %v1901 = vadd.f32 %v1887, %v1897
      %v1902 = vmul.f32 %v1900, 0.2
      %v1903 = vmul.f32 %v1901, 0.2
      %v1904 = vmax.f32 %v1900, %v1902
      %v1905 = vmax.f32 %v1901, %v1903
      %1906 = vst [vmem:[%s298] sm:$0xff] %v1904
      %1907 = vst [vmem:[%s298 + $0x8] sm:$0xff] %v1905
      %p1908 = scmp.lt.s32.totalorder %s18, 1
      %s1909 = scalar_select %p1908, %s18, 1
      %s1910 = smul.addr %s1909, 2
      %s1911 = smul.addr %s1910, 8
      %s1912 = scalar_lea.vmem %s7, %s1911
      // Predicated region
      $region49: #{up_forward.1} parent=47 // pred_check
        %p1913 = pneg %p193
      $region50: #{up_forward.1} parent=47 // pred_check_branch
        %1915 = sbr.rel (%p1913) target = $region52
      $region51: #{up_forward.1} parent=47 // pred_region
        _
      $region52: #{up_forward.1} parent=47 // pred_fallthru
        _
    $region48: #{up_forward.1} parent=5 // pred_fallthru
      _
    %p1916 = scmp.le.s32.totalorder 2, %s13
    // Predicated region
    $region53: #{up_forward.1} parent=5 // pred_check
      %p1917 = pneg %p1916
    $region54: #{up_forward.1} parent=5 // pred_check_branch
      %1919 = sbr.rel (%p1917) target = $region56
    $region55: #{up_forward.1} parent=5 // pred_region
      %s1920 = ssub.s32 %s13, 2
      // Predicated region
      $region57: #{up_forward.1} parent=55 // pred_check
        %p1921 = pneg %p199
      $region58: #{up_forward.1} parent=55 // pred_check_branch
        %1923 = sbr.rel (%p1921) target = $region60
      $region59: #{up_forward.1} parent=55 // pred_region
        %p1924 = scmp.lt.s32.totalorder %s19, 1
        %s1925 = scalar_select %p1924, %s19, 1
        %s1926 = smul.addr %s1925, 2
        %s1927 = smul.addr %s1926, 8
        %s1928 = scalar_lea.vmem %s7, %s1927
      $region60: #{up_forward.1} parent=55 // pred_fallthru
        _
    $region56: #{up_forward.1} parent=5 // pred_fallthru
      _
  $region6: #{up_forward.1} parent=0 // loop_footer
    %s17 = sadd.s32 1, %s13
  $region7: #{up_forward.1} parent=0 // loop_footer_branch
    %12 = sbr.rel target = $region3
  $region8: #{up_forward.1} parent=0 // loop_exit
    _

</llo_original>
